<compile_context>
chip_gen: v7x
topology: tpu7x:2x2x1
jax: 0.10.0
libtpu: 0.0.40
codegen_flags: <defaults>
</compile_context>

<pallas_src>
import jax
import jax.numpy as jnp
from jax.experimental import pallas as pl
from jax.experimental.pallas import tpu as pltpu


NEG_SLOPE = 0.1
BN_EPS = 1e-5
LANE = 128
SUBLANE_BF16 = 16   # bf16 native vreg tile is (16, 128): keep batch tiles % 16


def _round_up(a, m):
    return ((a + m - 1) // m) * m


def _leaky_relu(x):
    return jnp.where(x >= 0, x, NEG_SLOPE * x)


def mlp_kernel(
    x_ref,
    w1_ref, b1_ref,
    w2_ref, b2_ref,
    w3_ref, b3_ref,
    w4_ref, b4_ref,
    out_ref,
):
    # x arrives f32 straight from HBM (no host staging copy); cast to bf16 on
    # the VPU just before the MXU.  Accumulation + epilogue stay in f32.
    x = x_ref[...].astype(jnp.bfloat16)

    # Linear(D_in, 256) [BN folded into w1/b1] + LeakyReLU(0.1) [+ Dropout=id]
    h = jnp.dot(x, w1_ref[...], preferred_element_type=jnp.float32) + b1_ref[...]
    h = _leaky_relu(h)

    # Linear(256, 128) [BN folded into w2/b2] + LeakyReLU(0.1) [+ Dropout=id]
    h = jnp.dot(h.astype(jnp.bfloat16), w2_ref[...],
                preferred_element_type=jnp.float32) + b2_ref[...]
    h = _leaky_relu(h)

    # Linear(128, 64 -> padded 128) + LeakyReLU(0.1) [+ Dropout=id]
    h = jnp.dot(h.astype(jnp.bfloat16), w3_ref[...],
                preferred_element_type=jnp.float32) + b3_ref[...]
    h = _leaky_relu(h)

    # Linear(64->128, num_classes->padded 128) + LogSoftmax(dim=1).
    # Padded classes carry a -1e30 bias, so they vanish from max / logsumexp.
    logits = jnp.dot(h.astype(jnp.bfloat16), w4_ref[...],
                     preferred_element_type=jnp.float32) + b4_ref[...]
    m = jnp.max(logits, axis=-1, keepdims=True)
    shifted = logits - m
    lse = jnp.log(jnp.sum(jnp.exp(shifted), axis=-1, keepdims=True))
    out_ref[...] = (shifted - lse).astype(out_ref.dtype)


def _tpu_vmem_and_cores():
    """Returns (vmem_capacity_bytes, tensorcores_per_device, is_v5e) with safe fallbacks."""
    vmem_cap = 64 << 20   # conservative default (v7x per-TC capacity)
    try:
        info = pltpu.get_tpu_info()
        vmem_cap = int(getattr(info, "vmem_capacity_bytes", vmem_cap)) or vmem_cap
    except Exception:
        pass
    kind = ""
    try:
        kind = jax.devices()[0].device_kind.lower()
    except Exception:
        pass
    two_cores = any(tag in kind for tag in ("v4", "v5p", "v7"))
    is_v5e = ("v5e" in kind) or ("v5 lite" in kind) or ("v5lite" in kind)
    return vmem_cap, (2 if two_cores else 1), is_v5e


def _vmem_budget(vmem_cap):
    """Usable VMEM budget per generation (leave compiler scratch headroom)."""
    if vmem_cap <= (64 << 20):
        # v7x: 64 MiB per TensorCore physical -> ~52 MiB usable.
        return max(vmem_cap - (12 << 20), 32 << 20)
    # v5e / v6e: 128 MiB physical -> up to ~110 MiB usable.
    return min(vmem_cap - (20 << 20), 110 << 20)


def _tile_vmem_need(tb, d_pad, h1, h2, h3_pad, nc_pad, weight_bytes, x_bufs):
    x_tile = tb * d_pad * 4                        # f32 streamed x tile
    out_tile = tb * nc_pad * 4                     # f32 streamed out tile
    act = tb * (h1 + h2 + h3_pad + nc_pad) * 4     # f32 intermediates
    act += tb * (d_pad + h1 + h2 + h3_pad) * 2     # bf16 casts
    return (2 * weight_bytes + x_bufs * x_tile + 2 * out_tile
            + act + (4 << 20))


def _choose_tile_b(B, tile_b_max, d_pad, h1, h2, h3_pad, nc_pad,
                   weight_bytes, budget, min_steps, x_bufs):
    # Cap the tile so the batch grid has >= min_steps iterations when B allows
    # (both TensorCores busy on 2-TC chips; double-buffering hides the x DMA),
    # rounded to the bf16 sublane tile (16).
    step_cap = max(SUBLANE_BF16,
                   _round_up(-(-B // min_steps), SUBLANE_BF16))
    upper = max(SUBLANE_BF16, min(int(tile_b_max), step_cap))
    tb = upper - (upper % SUBLANE_BF16)
    tb = max(tb, SUBLANE_BF16)
    while tb > SUBLANE_BF16:
        if _tile_vmem_need(tb, d_pad, h1, h2, h3_pad, nc_pad,
                           weight_bytes, x_bufs) <= budget:
            break
        tb -= SUBLANE_BF16
    return max(tb, SUBLANE_BF16)


def classifier_mlp_forward(x_nchw, params, *, tile_b=1024):
    """x_nchw: [B, C, H, W] float32. Returns log-probs [B, num_classes]."""
    B = x_nchw.shape[0]
    x = x_nchw.reshape(B, -1)          # torch x.view(B, -1); row-major, free
    if x.dtype != jnp.float32:
        x = x.astype(jnp.float32)
    d_in = x.shape[1]

    (w1, b1, g1, be1, rm1, rv1,
     w2, b2, g2, be2, rm2, rv2,
     w3, b3,
     w4, b4) = params

    # ---- Fold BatchNorm (eval mode) into the preceding Linear, in f32. ----
    # NOTE: the fold couples 1/sqrt(running_var) with the bf16 weight cast; at
    # the stated 2e-2 tolerance this is fine (keep an f32 epilogue scale if
    # tighter accuracy is ever needed).
    s1 = g1 / jnp.sqrt(rv1 + BN_EPS)
    t1 = be1 - rm1 * s1
    s2 = g2 / jnp.sqrt(rv2 + BN_EPS)
    t2 = be2 - rm2 * s2
    w1f = w1 * s1[None, :]
    b1f = b1 * s1 + t1
    w2f = w2 * s2[None, :]
    b2f = b2 * s2 + t2

    h1 = w1.shape[1]            # 256
    h2 = w2.shape[1]            # 128
    h3 = w3.shape[1]            # 64
    num_classes = w4.shape[1]

    d_pad = _round_up(d_in, LANE)
    h3_pad = _round_up(h3, LANE)            # 64 -> 128
    nc_pad = _round_up(num_classes, LANE)   # 10 -> 128

    # ---- One-time padded / bf16 weight transforms (amortized across calls). ----
    w1p = jnp.pad(w1f, ((0, d_pad - d_in), (0, 0))).astype(jnp.bfloat16)
    b1p = b1f.reshape(1, h1).astype(jnp.float32)

    w2p = w2f.astype(jnp.bfloat16)
    b2p = b2f.reshape(1, h2).astype(jnp.float32)

    w3p = jnp.pad(w3, ((0, 0), (0, h3_pad - h3))).astype(jnp.bfloat16)
    b3p = jnp.pad(b3, (0, h3_pad - h3)).reshape(1, h3_pad).astype(jnp.float32)

    w4p = jnp.pad(w4, ((0, h3_pad - h3), (0, nc_pad - num_classes))).astype(jnp.bfloat16)
    b4p = jnp.full((1, nc_pad), -1e30, jnp.float32).at[0, :num_classes].set(b4)

    weight_bytes = 2 * (w1p.size + w2p.size + w3p.size + w4p.size) \
        + 4 * (b1p.size + b2p.size + b3p.size + b4p.size)

    # ---- Per-generation VMEM budget and batch-tile selection. ----
    vmem_cap, n_cores, is_v5e = _tpu_vmem_and_cores()
    budget = _vmem_budget(vmem_cap)
    x_bufs = 3 if is_v5e else 2
    min_steps = 4 if n_cores >= 2 else 2
    tb = _choose_tile_b(B, tile_b, d_pad, h1, h2, h3_pad, nc_pad,
                        weight_bytes, budget, min_steps, x_bufs)

    b_pad = _round_up(B, tb)
    grid = (b_pad // tb,)

    # x stays f32 all the way into the kernel (no host staging copy).  Pad only
    # when strictly needed; the common case (d_in % 128 == 0, B % tb == 0)
    # streams the caller's buffer directly.
    pad_rows = b_pad - B
    pad_cols = d_pad - d_in
    if pad_rows or pad_cols:
        x = jnp.pad(x, ((0, pad_rows), (0, pad_cols)))
    # TODO(synk): a pl.cdiv grid with a masked tail block would avoid even this
    #   pad copy when B % tb != 0; rows are independent so it would be safe.

    vmem_need = _tile_vmem_need(tb, d_pad, h1, h2, h3_pad, nc_pad,
                                weight_bytes, x_bufs)
    vmem_limit = int(min(max(vmem_need, 16 << 20), budget))

    resident = lambda i: (0, 0)
    x_map = lambda i: (i, 0)

    x_spec = pl.BlockSpec((tb, d_pad), x_map)
    if is_v5e:
        # v5e sits near the compute/memory crossover; a third x buffer smooths
        # the per-step MXU/DMA alternation.  Fall back silently if pipeline_mode
        # is unavailable in the running JAX version.
        try:
            x_spec = pl.BlockSpec((tb, d_pad), x_map,
                                  pipeline_mode=pl.Buffered(3))
        except Exception:
            x_spec = pl.BlockSpec((tb, d_pad), x_map)

    in_specs = [
        x_spec,                                       # x: streamed over batch
        pl.BlockSpec((d_pad, h1), resident),          # w1 (BN folded)
        pl.BlockSpec((1, h1), resident),              # b1
        pl.BlockSpec((h1, h2), resident),             # w2 (BN folded)
        pl.BlockSpec((1, h2), resident),              # b2
        pl.BlockSpec((h2, h3_pad), resident),         # w3
        pl.BlockSpec((1, h3_pad), resident),          # b3
        pl.BlockSpec((h3_pad, nc_pad), resident),     # w4
        pl.BlockSpec((1, nc_pad), resident),          # b4
    ]
    out_spec = pl.BlockSpec((tb, nc_pad), x_map)

    out_pad = pl.pallas_call(
        mlp_kernel,
        out_shape=jax.ShapeDtypeStruct((b_pad, nc_pad), jnp.float32),
        grid=grid,
        in_specs=in_specs,
        out_specs=out_spec,
        compiler_params=pltpu.CompilerParams(
            dimension_semantics=("parallel",),
            vmem_limit_bytes=vmem_limit,
        ),
    )(x, w1p, b1p, w2p, b2p, w3p, b3p, w4p, b4p)

    return out_pad[:B, :num_classes]


def init_params(key, input_size, num_classes=10):
    """Deterministic synthetic parameters (PyTorch-like uniform init)."""
    def linear(k, fan_in, fan_out):
        kw, kb = jax.random.split(k)
        bound = 1.0 / jnp.sqrt(fan_in)
        w = jax.random.uniform(kw, (fan_in, fan_out), jnp.float32, -bound, bound)
        b = jax.random.uniform(kb, (fan_out,), jnp.float32, -bound, bound)
        return w, b

    k1, k2, k3, k4 = jax.random.split(key, 4)
    w1, b1 = linear(k1, input_size, 256)
    w2, b2 = linear(k2, 256, 128)
    w3, b3 = linear(k3, 128, 64)
    w4, b4 = linear(k4, 64, num_classes)

    # BatchNorm1d params / running stats at default init.
    g1, be1 = jnp.ones((256,), jnp.float32), jnp.zeros((256,), jnp.float32)
    rm1, rv1 = jnp.zeros((256,), jnp.float32), jnp.ones((256,), jnp.float32)
    g2, be2 = jnp.ones((128,), jnp.float32), jnp.zeros((128,), jnp.float32)
    rm2, rv2 = jnp.zeros((128,), jnp.float32), jnp.ones((128,), jnp.float32)

    return (w1, b1, g1, be1, rm1, rv1,
            w2, b2, g2, be2, rm2, rv2,
            w3, b3,
            w4, b4)


def reference_forward(x_nchw, params):
    """Pure-JAX f32 reference (same eval-mode semantics) for a sanity check."""
    B = x_nchw.shape[0]
    x = x_nchw.reshape(B, -1)
    (w1, b1, g1, be1, rm1, rv1,
     w2, b2, g2, be2, rm2, rv2,
     w3, b3, w4, b4) = params
    h = x @ w1 + b1
    h = (h - rm1) / jnp.sqrt(rv1 + BN_EPS) * g1 + be1
    h = jnp.where(h >= 0, h, NEG_SLOPE * h)
    h = h @ w2 + b2
    h = (h - rm2) / jnp.sqrt(rv2 + BN_EPS) * g2 + be2
    h = jnp.where(h >= 0, h, NEG_SLOPE * h)
    h = h @ w3 + b3
    h = jnp.where(h >= 0, h, NEG_SLOPE * h)
    logits = h @ w4 + b4
    return jax.nn.log_softmax(logits, axis=1)


if __name__ == "__main__":
    key = jax.random.PRNGKey(0)
    kx, kp = jax.random.split(key)

    # Small shapes: batch=2, channels=4, spatial=16 -> input_size = 4*16*16 = 1024
    B, C, H, W = 2, 4, 16, 16
    input_size = C * H * W
    num_classes = 10

    x = jax.random.normal(kx, (B, C, H, W), jnp.float32)
    params = init_params(kp, input_size, num_classes)

    out = classifier_mlp_forward(x, params)
    out = jax.block_until_ready(out)

    ref = reference_forward(x, params)
    assert out.shape == (B, num_classes)
    # bf16 weights/activations on the MXU vs f32 reference -> loose-but-tight tolerance.
    assert jnp.allclose(out, ref, atol=2e-2, rtol=2e-2), "mismatch vs reference"
    assert jnp.allclose(jnp.sum(jnp.exp(out), axis=1), 1.0, atol=1e-4)

    print("KERNEL_OK")
</pallas_src>

<mosaic_0001>
module attributes {stable_mosaic.version = 11 : i64} {
  func.func @mlp_kernel(%arg0: i32, %arg1: memref<16x1024xf32, #tpu.memory_space<vmem>>, %arg2: memref<1024x256xbf16, #tpu.memory_space<vmem>>, %arg3: memref<1x256xf32, #tpu.memory_space<vmem>>, %arg4: memref<256x128xbf16, #tpu.memory_space<vmem>>, %arg5: memref<1x128xf32, #tpu.memory_space<vmem>>, %arg6: memref<128x128xbf16, #tpu.memory_space<vmem>>, %arg7: memref<1x128xf32, #tpu.memory_space<vmem>>, %arg8: memref<128x128xbf16, #tpu.memory_space<vmem>>, %arg9: memref<1x128xf32, #tpu.memory_space<vmem>>, %arg10: memref<16x128xf32, #tpu.memory_space<vmem>>) attributes {dimension_semantics = [#tpu.dimension_semantics<parallel>], iteration_bounds = array<i64: 1>, scalar_prefetch = 0 : i64, scratch_operands = 0 : i64, tpu.core_type = #tpu.core_type<tc>, window_params = [{transform_indices = @transform_0, window_bounds = array<i64: 16, 1024>}, {pipeline_mode = #tpu.pipeline_mode<synchronous>, transform_indices = @transform_1, window_bounds = array<i64: 1024, 256>}, {pipeline_mode = #tpu.pipeline_mode<synchronous>, transform_indices = @transform_2, window_bounds = array<i64: 1, 256>}, {pipeline_mode = #tpu.pipeline_mode<synchronous>, transform_indices = @transform_3, window_bounds = array<i64: 256, 128>}, {pipeline_mode = #tpu.pipeline_mode<synchronous>, transform_indices = @transform_4, window_bounds = array<i64: 1, 128>}, {pipeline_mode = #tpu.pipeline_mode<synchronous>, transform_indices = @transform_5, window_bounds = array<i64: 128, 128>}, {pipeline_mode = #tpu.pipeline_mode<synchronous>, transform_indices = @transform_6, window_bounds = array<i64: 1, 128>}, {pipeline_mode = #tpu.pipeline_mode<synchronous>, transform_indices = @transform_7, window_bounds = array<i64: 128, 128>}, {pipeline_mode = #tpu.pipeline_mode<synchronous>, transform_indices = @transform_8, window_bounds = array<i64: 1, 128>}, {transform_indices = @transform_9, window_bounds = array<i64: 16, 128>}]} {
    %c0 = arith.constant 0 : index
    %c0_0 = arith.constant 0 : index
    %0 = vector.load %arg1[%c0, %c0_0] : memref<16x1024xf32, #tpu.memory_space<vmem>>, vector<16x1024xf32>
    %1 = arith.truncf %0 : vector<16x1024xf32> to vector<16x1024xbf16>
    %c0_1 = arith.constant 0 : index
    %c0_2 = arith.constant 0 : index
    %2 = vector.load %arg2[%c0_1, %c0_2] : memref<1024x256xbf16, #tpu.memory_space<vmem>>, vector<1024x256xbf16>
    %cst = arith.constant dense<0.000000e+00> : vector<16x256xf32>
    %3 = tpu.matmul %1, %2, %cst {dimension_numbers = #tpu.dot_dimension_numbers<[1], [0], [0], [1], [0, 0, 1, 1], [], []>} : vector<16x1024xbf16>, vector<1024x256xbf16>, vector<16x256xf32> -> vector<16x256xf32>
    %c0_3 = arith.constant 0 : index
    %c0_4 = arith.constant 0 : index
    %4 = vector.load %arg3[%c0_3, %c0_4] : memref<1x256xf32, #tpu.memory_space<vmem>>, vector<1x256xf32>
    %5 = vector.broadcast %4 : vector<1x256xf32> to vector<16x256xf32>
    %6 = arith.addf %3, %5 : vector<16x256xf32>
    %cst_5 = arith.constant 0.000000e+00 : f32
    %7 = vector.broadcast %cst_5 : f32 to vector<16x256xf32>
    %8 = arith.cmpf oge, %6, %7 : vector<16x256xf32>
    %cst_6 = arith.constant 1.000000e-01 : f32
    %9 = vector.broadcast %cst_6 : f32 to vector<16x256xf32>
    %10 = arith.mulf %9, %6 : vector<16x256xf32>
    %11 = arith.select %8, %6, %10 : vector<16x256xi1>, vector<16x256xf32>
    %12 = arith.truncf %11 : vector<16x256xf32> to vector<16x256xbf16>
    %c0_7 = arith.constant 0 : index
    %c0_8 = arith.constant 0 : index
    %13 = vector.load %arg4[%c0_7, %c0_8] : memref<256x128xbf16, #tpu.memory_space<vmem>>, vector<256x128xbf16>
    %cst_9 = arith.constant dense<0.000000e+00> : vector<16x128xf32>
    %14 = tpu.matmul %12, %13, %cst_9 {dimension_numbers = #tpu.dot_dimension_numbers<[1], [0], [0], [1], [0, 0, 1, 1], [], []>} : vector<16x256xbf16>, vector<256x128xbf16>, vector<16x128xf32> -> vector<16x128xf32>
    %c0_10 = arith.constant 0 : index
    %c0_11 = arith.constant 0 : index
    %15 = vector.load %arg5[%c0_10, %c0_11] : memref<1x128xf32, #tpu.memory_space<vmem>>, vector<1x128xf32>
    %16 = vector.broadcast %15 : vector<1x128xf32> to vector<16x128xf32>
    %17 = arith.addf %14, %16 : vector<16x128xf32>
    %cst_12 = arith.constant 0.000000e+00 : f32
    %18 = vector.broadcast %cst_12 : f32 to vector<16x128xf32>
    %19 = arith.cmpf oge, %17, %18 : vector<16x128xf32>
    %cst_13 = arith.constant 1.000000e-01 : f32
    %20 = vector.broadcast %cst_13 : f32 to vector<16x128xf32>
    %21 = arith.mulf %20, %17 : vector<16x128xf32>
    %22 = arith.select %19, %17, %21 : vector<16x128xi1>, vector<16x128xf32>
    %23 = arith.truncf %22 : vector<16x128xf32> to vector<16x128xbf16>
    %c0_14 = arith.constant 0 : index
    %c0_15 = arith.constant 0 : index
    %24 = vector.load %arg6[%c0_14, %c0_15] : memref<128x128xbf16, #tpu.memory_space<vmem>>, vector<128x128xbf16>
    %cst_16 = arith.constant dense<0.000000e+00> : vector<16x128xf32>
    %25 = tpu.matmul %23, %24, %cst_16 {dimension_numbers = #tpu.dot_dimension_numbers<[1], [0], [0], [1], [0, 0, 1, 1], [], []>} : vector<16x128xbf16>, vector<128x128xbf16>, vector<16x128xf32> -> vector<16x128xf32>
    %c0_17 = arith.constant 0 : index
    %c0_18 = arith.constant 0 : index
    %26 = vector.load %arg7[%c0_17, %c0_18] : memref<1x128xf32, #tpu.memory_space<vmem>>, vector<1x128xf32>
    %27 = vector.broadcast %26 : vector<1x128xf32> to vector<16x128xf32>
    %28 = arith.addf %25, %27 : vector<16x128xf32>
    %cst_19 = arith.constant 0.000000e+00 : f32
    %29 = vector.broadcast %cst_19 : f32 to vector<16x128xf32>
    %30 = arith.cmpf oge, %28, %29 : vector<16x128xf32>
    %cst_20 = arith.constant 1.000000e-01 : f32
    %31 = vector.broadcast %cst_20 : f32 to vector<16x128xf32>
    %32 = arith.mulf %31, %28 : vector<16x128xf32>
    %33 = arith.select %30, %28, %32 : vector<16x128xi1>, vector<16x128xf32>
    %34 = arith.truncf %33 : vector<16x128xf32> to vector<16x128xbf16>
    %c0_21 = arith.constant 0 : index
    %c0_22 = arith.constant 0 : index
    %35 = vector.load %arg8[%c0_21, %c0_22] : memref<128x128xbf16, #tpu.memory_space<vmem>>, vector<128x128xbf16>
    %cst_23 = arith.constant dense<0.000000e+00> : vector<16x128xf32>
    %36 = tpu.matmul %34, %35, %cst_23 {dimension_numbers = #tpu.dot_dimension_numbers<[1], [0], [0], [1], [0, 0, 1, 1], [], []>} : vector<16x128xbf16>, vector<128x128xbf16>, vector<16x128xf32> -> vector<16x128xf32>
    %c0_24 = arith.constant 0 : index
    %c0_25 = arith.constant 0 : index
    %37 = vector.load %arg9[%c0_24, %c0_25] : memref<1x128xf32, #tpu.memory_space<vmem>>, vector<1x128xf32>
    %38 = vector.broadcast %37 : vector<1x128xf32> to vector<16x128xf32>
    %39 = arith.addf %36, %38 : vector<16x128xf32>
    %cst_26 = arith.constant dense<0xFF800000> : vector<16xf32>
    %40 = vector.multi_reduction <maximumf>, %39, %cst_26 [1] : vector<16x128xf32> to vector<16xf32>
    %41 = vector.shape_cast %40 : vector<16xf32> to vector<16x1xf32>
    %42 = vector.broadcast %41 : vector<16x1xf32> to vector<16x128xf32>
    %43 = arith.subf %39, %42 : vector<16x128xf32>
    %44 = math.exp %43 : vector<16x128xf32>
    %cst_27 = arith.constant dense<0.000000e+00> : vector<16xf32>
    %45 = vector.multi_reduction <add>, %44, %cst_27 [1] : vector<16x128xf32> to vector<16xf32>
    %46 = vector.shape_cast %45 : vector<16xf32> to vector<16x1xf32>
    %47 = math.log %46 : vector<16x1xf32>
    %48 = vector.broadcast %47 : vector<16x1xf32> to vector<16x128xf32>
    %49 = arith.subf %43, %48 : vector<16x128xf32>
    %c0_28 = arith.constant 0 : index
    %c0_29 = arith.constant 0 : index
    %50 = vector.load %arg10[%c0_28, %c0_29] : memref<16x128xf32, #tpu.memory_space<vmem>>, vector<16x128xf32>
    tpu.vector_store %arg10[%c0_28, %c0_29], %49 {strides = array<i32>} : memref<16x128xf32, #tpu.memory_space<vmem>>, vector<16x128xf32>,
    return
  }
  func.func @transform_0(%arg0: i32) -> (i32, i32) {
    %c0_i32 = arith.constant 0 : i32
    %c0_i32_0 = arith.constant 0 : i32
    return %arg0, %c0_i32 : i32, i32
  }
  func.func @transform_1(%arg0: i32) -> (i32, i32) {
    %c0_i32 = arith.constant 0 : i32
    %c0_i32_0 = arith.constant 0 : i32
    %c0_i32_1 = arith.constant 0 : i32
    return %c0_i32, %c0_i32_0 : i32, i32
  }
  func.func @transform_2(%arg0: i32) -> (i32, i32) {
    %c0_i32 = arith.constant 0 : i32
    %c0_i32_0 = arith.constant 0 : i32
    %c0_i32_1 = arith.constant 0 : i32
    return %c0_i32, %c0_i32_0 : i32, i32
  }
  func.func @transform_3(%arg0: i32) -> (i32, i32) {
    %c0_i32 = arith.constant 0 : i32
    %c0_i32_0 = arith.constant 0 : i32
    %c0_i32_1 = arith.constant 0 : i32
    return %c0_i32, %c0_i32_0 : i32, i32
  }
  func.func @transform_4(%arg0: i32) -> (i32, i32) {
    %c0_i32 = arith.constant 0 : i32
    %c0_i32_0 = arith.constant 0 : i32
    %c0_i32_1 = arith.constant 0 : i32
    return %c0_i32, %c0_i32_0 : i32, i32
  }
  func.func @transform_5(%arg0: i32) -> (i32, i32) {
    %c0_i32 = arith.constant 0 : i32
    %c0_i32_0 = arith.constant 0 : i32
    %c0_i32_1 = arith.constant 0 : i32
    return %c0_i32, %c0_i32_0 : i32, i32
  }
  func.func @transform_6(%arg0: i32) -> (i32, i32) {
    %c0_i32 = arith.constant 0 : i32
    %c0_i32_0 = arith.constant 0 : i32
    %c0_i32_1 = arith.constant 0 : i32
    return %c0_i32, %c0_i32_0 : i32, i32
  }
  func.func @transform_7(%arg0: i32) -> (i32, i32) {
    %c0_i32 = arith.constant 0 : i32
    %c0_i32_0 = arith.constant 0 : i32
    %c0_i32_1 = arith.constant 0 : i32
    return %c0_i32, %c0_i32_0 : i32, i32
  }
  func.func @transform_8(%arg0: i32) -> (i32, i32) {
    %c0_i32 = arith.constant 0 : i32
    %c0_i32_0 = arith.constant 0 : i32
    %c0_i32_1 = arith.constant 0 : i32
    return %c0_i32, %c0_i32_0 : i32, i32
  }
  func.func @transform_9(%arg0: i32) -> (i32, i32) {
    %c0_i32 = arith.constant 0 : i32
    %c0_i32_0 = arith.constant 0 : i32
    return %arg0, %c0_i32 : i32, i32
  }
}

</mosaic_0001>

<llo_original>
// kernel: tpu_custom_call.1
$region0: #{tpu_custom_call.1}
  #allocation0 [shape = 'u32[]', space=smem, size = 0x4, offset = 0x4, fixed_abs, tag = 'smem constant byte address 0x4 - core index']
  #allocation1 [shape = 'u32[144,128]{1,0:T(1,128)}', space=vmem, size = 0x12000, scoped, tag = 'internal scratch']
  %s0 = inlined_call_operand.hbm [shape: f32[16,1024], index: 0, kind: input, shape index: {}]
  %s1 = inlined_call_operand.hbm [shape: bf16[1024,256], index: 1, kind: input, shape index: {}]
  %s2 = inlined_call_operand.vmem [shape: f32[1,256], index: 2, kind: input, shape index: {}]
  %s3 = inlined_call_operand.hbm [shape: bf16[256,128], index: 3, kind: input, shape index: {}]
  %s4 = inlined_call_operand.vmem [shape: f32[1,128], index: 4, kind: input, shape index: {}]
  %s5 = inlined_call_operand.hbm [shape: bf16[128,128], index: 5, kind: input, shape index: {}]
  %s6 = inlined_call_operand.vmem [shape: f32[1,128], index: 6, kind: input, shape index: {}]
  %s7 = inlined_call_operand.hbm [shape: bf16[128,128], index: 7, kind: input, shape index: {}]
  %s8 = inlined_call_operand.vmem [shape: f32[1,128], index: 8, kind: input, shape index: {}]
  %s9 = inlined_call_operand.hbm [shape: f32[16,128], index: 9, kind: output, shape index: {}]
  %s10 = sld [smem:[#allocation0]]
  $region66: #{tpu_custom_call.1} parent=0
    _
  %s12 = ssub.s32 1, %s10
  %s13 = scalar_select 0, %s12, %s10
  $region1: #{tpu_custom_call.1} parent=0
    #allocation2 [shape = 'u8[65536]{0}', space=vmem, size = 0x10000, scoped, tag = 'input window, operand 0, single buffered']
    #allocation3 [shape = 's32[1]{0}', space=sflag, size = 0x4, scoped, tag = 'scoped memory for tpu_custom_call.1']
    #allocation4 [shape = 's32[1]{0}', space=sflag, size = 0x4, scoped, tag = 'scoped memory for tpu_custom_call.1']
    #allocation5 [shape = 'u8[524288]{0}', space=vmem, size = 0x80000, scoped, tag = 'input window, operand 1, single buffered']
    #allocation6 [shape = 's32[1]{0}', space=sflag, size = 0x4, scoped, tag = 'scoped memory for tpu_custom_call.1']
    #allocation7 [shape = 'u8[65536]{0}', space=vmem, size = 0x10000, scoped, tag = 'input window, operand 3, single buffered']
    #allocation8 [shape = 'u8[32768]{0}', space=vmem, size = 0x8000, scoped, tag = 'input window, operand 5, single buffered']
    #allocation9 [shape = 's32[1]{0}', space=sflag, size = 0x4, scoped, tag = 'scoped memory for tpu_custom_call.1']
    #allocation10 [shape = 'u8[32768]{0}', space=vmem, size = 0x8000, scoped, tag = 'input window, operand 7, single buffered']
    #allocation11 [shape = 'u8[8192]{0}', space=vmem, size = 0x2000, scoped, tag = 'output window, operand 0, single buffered']
    %14 = vsyncpa [#allocation3], 0
    %15 = vsyncpa [#allocation6], 0
    %16 = vsyncpa [#allocation9], 0
    %17 = vsyncpa [#allocation4], 0
    // Predicated region
    $region2: #{tpu_custom_call.1} parent=1 // pred_check
      _
    $region3: #{tpu_custom_call.1} parent=1 // pred_check_branch
      %19 = sbr.rel (0) target = $region5
    $region4: #{tpu_custom_call.1} parent=1 // pred_region
      %s21 = ssub.s32 2048, 2048
      %22 = vsyncadd [#allocation3], %s21
      %s23 = sshll.u32 [#allocation2], 4
      %s24 = int_to_ptr.vmem [resolvable:$true] %s23
      %29 = dma.hbm_to_vmem [thread:$0]  %s0, 2048, %s24, [#allocation3], 1024, 1024, 64
    $region5: #{tpu_custom_call.1} parent=1 // pred_fallthru
      _
    // Predicated region
    $region6: #{tpu_custom_call.1} parent=1 // pred_check
      _
    $region7: #{tpu_custom_call.1} parent=1 // pred_check_branch
      %31 = sbr.rel (0) target = $region9
    $region8: #{tpu_custom_call.1} parent=1 // pred_region
      %s33 = ssub.s32 16384, 16384
      %34 = vsyncadd [#allocation6], %s33
      %s35 = sshll.u32 [#allocation5], 4
      %s36 = int_to_ptr.vmem [resolvable:$true] %s35
      %41 = dma.hbm_to_vmem [thread:$0]  %s1, 16384, %s36, [#allocation6], 128, 128, 8
    $region9: #{tpu_custom_call.1} parent=1 // pred_fallthru
      _
    // Predicated region
    $region10: #{tpu_custom_call.1} parent=1 // pred_check
      _
    $region11: #{tpu_custom_call.1} parent=1 // pred_check_branch
      %43 = sbr.rel (0) target = $region13
    $region12: #{tpu_custom_call.1} parent=1 // pred_region
      _
    $region13: #{tpu_custom_call.1} parent=1 // pred_fallthru
      _
    // Predicated region
    $region14: #{tpu_custom_call.1} parent=1 // pred_check
      _
    $region15: #{tpu_custom_call.1} parent=1 // pred_check_branch
      %45 = sbr.rel (0) target = $region17
    $region16: #{tpu_custom_call.1} parent=1 // pred_region
      %s47 = ssub.s32 2048, 2048
      %48 = vsyncadd [#allocation6], %s47
      %s49 = sshll.u32 [#allocation7], 4
      %s50 = int_to_ptr.vmem [resolvable:$true] %s49
      %55 = dma.hbm_to_vmem [thread:$0]  %s3, 2048, %s50, [#allocation6], 64, 64, 4
    $region17: #{tpu_custom_call.1} parent=1 // pred_fallthru
      _
    // Predicated region
    $region18: #{tpu_custom_call.1} parent=1 // pred_check
      _
    $region19: #{tpu_custom_call.1} parent=1 // pred_check_branch
      %57 = sbr.rel (0) target = $region21
    $region20: #{tpu_custom_call.1} parent=1 // pred_region
      _
    $region21: #{tpu_custom_call.1} parent=1 // pred_fallthru
      _
    // Predicated region
    $region22: #{tpu_custom_call.1} parent=1 // pred_check
      _
    $region23: #{tpu_custom_call.1} parent=1 // pred_check_branch
      %59 = sbr.rel (0) target = $region25
    $region24: #{tpu_custom_call.1} parent=1 // pred_region
      %s61 = ssub.s32 1024, 1024
      %62 = vsyncadd [#allocation9], %s61
      %s63 = sshll.u32 [#allocation8], 4
      %s64 = int_to_ptr.vmem [resolvable:$true] %s63
      %69 = dma.hbm_to_vmem [thread:$0]  %s5, 1024, %s64, [#allocation9], 64, 64, 4
    $region25: #{tpu_custom_call.1} parent=1 // pred_fallthru
      _
    // Predicated region
    $region26: #{tpu_custom_call.1} parent=1 // pred_check
      _
    $region27: #{tpu_custom_call.1} parent=1 // pred_check_branch
      %71 = sbr.rel (0) target = $region29
    $region28: #{tpu_custom_call.1} parent=1 // pred_region
      _
    $region29: #{tpu_custom_call.1} parent=1 // pred_fallthru
      _
    // Predicated region
    $region30: #{tpu_custom_call.1} parent=1 // pred_check
      _
    $region31: #{tpu_custom_call.1} parent=1 // pred_check_branch
      %73 = sbr.rel (0) target = $region33
    $region32: #{tpu_custom_call.1} parent=1 // pred_region
      %s75 = ssub.s32 1024, 1024
      %76 = vsyncadd [#allocation9], %s75
      %s77 = sshll.u32 [#allocation10], 4
      %s78 = int_to_ptr.vmem [resolvable:$true] %s77
      %83 = dma.hbm_to_vmem [thread:$0]  %s7, 1024, %s78, [#allocation9], 64, 64, 4
    $region33: #{tpu_custom_call.1} parent=1 // pred_fallthru
      _
    // Predicated region
    $region34: #{tpu_custom_call.1} parent=1 // pred_check
      _
    $region35: #{tpu_custom_call.1} parent=1 // pred_check_branch
      %85 = sbr.rel (0) target = $region37
    $region36: #{tpu_custom_call.1} parent=1 // pred_region
      _
    $region37: #{tpu_custom_call.1} parent=1 // pred_fallthru
      _
    // Predicated region
    $region38: #{tpu_custom_call.1} parent=1 // pred_check
      _
    $region39: #{tpu_custom_call.1} parent=1 // pred_check_branch
      %87 = sbr.rel (0) target = $region41
    $region40: #{tpu_custom_call.1} parent=1 // pred_region
      %88 = dma.done [#allocation3], 2048
    $region41: #{tpu_custom_call.1} parent=1 // pred_fallthru
      _
    // Predicated region
    $region42: #{tpu_custom_call.1} parent=1 // pred_check
      _
    $region43: #{tpu_custom_call.1} parent=1 // pred_check_branch
      %90 = sbr.rel (0) target = $region45
    $region44: #{tpu_custom_call.1} parent=1 // pred_region
      %91 = dma.done [#allocation6], 16384
    $region45: #{tpu_custom_call.1} parent=1 // pred_fallthru
      _
    // Predicated region
    $region46: #{tpu_custom_call.1} parent=1 // pred_check
      _
    $region47: #{tpu_custom_call.1} parent=1 // pred_check_branch
      %93 = sbr.rel (0) target = $region49
    $region48: #{tpu_custom_call.1} parent=1 // pred_region
      %94 = dma.done [#allocation6], 2048
    $region49: #{tpu_custom_call.1} parent=1 // pred_fallthru
      _
    // Predicated region
    $region50: #{tpu_custom_call.1} parent=1 // pred_check
      _
    $region51: #{tpu_custom_call.1} parent=1 // pred_check_branch
      %96 = sbr.rel (0) target = $region53
    $region52: #{tpu_custom_call.1} parent=1 // pred_region
      %97 = dma.done [#allocation9], 1024
    $region53: #{tpu_custom_call.1} parent=1 // pred_fallthru
      _
    // Predicated region
    $region54: #{tpu_custom_call.1} parent=1 // pred_check
      _
    $region55: #{tpu_custom_call.1} parent=1 // pred_check_branch
      %99 = sbr.rel (0) target = $region57
    $region56: #{tpu_custom_call.1} parent=1 // pred_region
      %100 = dma.done [#allocation9], 1024
    $region57: #{tpu_custom_call.1} parent=1 // pred_fallthru
      _
    %v102 = vld [vmem:[#allocation2] sm:$0xff]
    %v103 = vld [vmem:[#allocation2 + $0x8] sm:$0xff]
    %v104 = vld [vmem:[#allocation2 + $0x10] sm:$0xff]
    %v105 = vld [vmem:[#allocation2 + $0x18] sm:$0xff]
    %v106 = vld [vmem:[#allocation2 + $0x20] sm:$0xff]
    %v107 = vld [vmem:[#allocation2 + $0x28] sm:$0xff]
    %v108 = vld [vmem:[#allocation2 + $0x30] sm:$0xff]
    %v109 = vld [vmem:[#allocation2 + $0x38] sm:$0xff]
    %v110 = vld [vmem:[#allocation2 + $0x40] sm:$0xff]
    %v111 = vld [vmem:[#allocation2 + $0x48] sm:$0xff]
    %v112 = vld [vmem:[#allocation2 + $0x50] sm:$0xff]
    %v113 = vld [vmem:[#allocation2 + $0x58] sm:$0xff]
    %v114 = vld [vmem:[#allocation2 + $0x60] sm:$0xff]
    %v115 = vld [vmem:[#allocation2 + $0x68] sm:$0xff]
    %v116 = vld [vmem:[#allocation2 + $0x70] sm:$0xff]
    %v117 = vld [vmem:[#allocation2 + $0x78] sm:$0xff]
    %v118 = vpack.c.bf16 %v110, %v102
    %v119 = vpack.c.bf16 %v111, %v103
    %v120 = vpack.c.bf16 %v112, %v104
    %v121 = vpack.c.bf16 %v113, %v105
    %v122 = vpack.c.bf16 %v114, %v106
    %v123 = vpack.c.bf16 %v115, %v107
    %v124 = vpack.c.bf16 %v116, %v108
    %v125 = vpack.c.bf16 %v117, %v109
    %v126 = vld [vmem:[#allocation5] sm:$0xff]
    %v127 = vld [vmem:[#allocation5 + $0x8] sm:$0xff]
    %v128 = vld [vmem:[#allocation5 + $0x10] sm:$0xff]
    %v129 = vld [vmem:[#allocation5 + $0x18] sm:$0xff]
    %v130 = vld [vmem:[#allocation5 + $0x20] sm:$0xff]
    %v131 = vld [vmem:[#allocation5 + $0x28] sm:$0xff]
    %v132 = vld [vmem:[#allocation5 + $0x30] sm:$0xff]
    %v133 = vld [vmem:[#allocation5 + $0x38] sm:$0xff]
    %v134 = vld [vmem:[#allocation5 + $0x40] sm:$0xff]
    %v135 = vld [vmem:[#allocation5 + $0x48] sm:$0xff]
    %v136 = vld [vmem:[#allocation5 + $0x50] sm:$0xff]
    %v137 = vld [vmem:[#allocation5 + $0x58] sm:$0xff]
    %v138 = vld [vmem:[#allocation5 + $0x60] sm:$0xff]
    %v139 = vld [vmem:[#allocation5 + $0x68] sm:$0xff]
    %v140 = vld [vmem:[#allocation5 + $0x70] sm:$0xff]
    %v141 = vld [vmem:[#allocation5 + $0x78] sm:$0xff]
    %v142 = vld [vmem:[#allocation5 + $0x80] sm:$0xff]
    %v143 = vld [vmem:[#allocation5 + $0x88] sm:$0xff]
    %v144 = vld [vmem:[#allocation5 + $0x90] sm:$0xff]
    %v145 = vld [vmem:[#allocation5 + $0x98] sm:$0xff]
    %v146 = vld [vmem:[#allocation5 + $0xa0] sm:$0xff]
    %v147 = vld [vmem:[#allocation5 + $0xa8] sm:$0xff]
    %v148 = vld [vmem:[#allocation5 + $0xb0] sm:$0xff]
    %v149 = vld [vmem:[#allocation5 + $0xb8] sm:$0xff]
    %v150 = vld [vmem:[#allocation5 + $0xc0] sm:$0xff]
    %v151 = vld [vmem:[#allocation5 + $0xc8] sm:$0xff]
    %v152 = vld [vmem:[#allocation5 + $0xd0] sm:$0xff]
    %v153 = vld [vmem:[#allocation5 + $0xd8] sm:$0xff]
    %v154 = vld [vmem:[#allocation5 + $0xe0] sm:$0xff]
    %v155 = vld [vmem:[#allocation5 + $0xe8] sm:$0xff]
    %v156 = vld [vmem:[#allocation5 + $0xf0] sm:$0xff]
    %v157 = vld [vmem:[#allocation5 + $0xf8] sm:$0xff]
    %v158 = vld [vmem:[#allocation5 + $0x100] sm:$0xff]
    %v159 = vld [vmem:[#allocation5 + $0x108] sm:$0xff]
    %v160 = vld [vmem:[#allocation5 + $0x110] sm:$0xff]
    %v161 = vld [vmem:[#allocation5 + $0x118] sm:$0xff]
    %v162 = vld [vmem:[#allocation5 + $0x120] sm:$0xff]
    %v163 = vld [vmem:[#allocation5 + $0x128] sm:$0xff]
    %v164 = vld [vmem:[#allocation5 + $0x130] sm:$0xff]
    %v165 = vld [vmem:[#allocation5 + $0x138] sm:$0xff]
    %v166 = vld [vmem:[#allocation5 + $0x140] sm:$0xff]
    %v167 = vld [vmem:[#allocation5 + $0x148] sm:$0xff]
    %v168 = vld [vmem:[#allocation5 + $0x150] sm:$0xff]
    %v169 = vld [vmem:[#allocation5 + $0x158] sm:$0xff]
    %v170 = vld [vmem:[#allocation5 + $0x160] sm:$0xff]
    %v171 = vld [vmem:[#allocation5 + $0x168] sm:$0xff]
    %v172 = vld [vmem:[#allocation5 + $0x170] sm:$0xff]
    %v173 = vld [vmem:[#allocation5 + $0x178] sm:$0xff]
    %v174 = vld [vmem:[#allocation5 + $0x180] sm:$0xff]
    %v175 = vld [vmem:[#allocation5 + $0x188] sm:$0xff]
    %v176 = vld [vmem:[#allocation5 + $0x190] sm:$0xff]
    %v177 = vld [vmem:[#allocation5 + $0x198] sm:$0xff]
    %v178 = vld [vmem:[#allocation5 + $0x1a0] sm:$0xff]
    %v179 = vld [vmem:[#allocation5 + $0x1a8] sm:$0xff]
    %v180 = vld [vmem:[#allocation5 + $0x1b0] sm:$0xff]
    %v181 = vld [vmem:[#allocation5 + $0x1b8] sm:$0xff]
    %v182 = vld [vmem:[#allocation5 + $0x1c0] sm:$0xff]
    %v183 = vld [vmem:[#allocation5 + $0x1c8] sm:$0xff]
    %v184 = vld [vmem:[#allocation5 + $0x1d0] sm:$0xff]
    %v185 = vld [vmem:[#allocation5 + $0x1d8] sm:$0xff]
    %v186 = vld [vmem:[#allocation5 + $0x1e0] sm:$0xff]
    %v187 = vld [vmem:[#allocation5 + $0x1e8] sm:$0xff]
    %v188 = vld [vmem:[#allocation5 + $0x1f0] sm:$0xff]
    %v189 = vld [vmem:[#allocation5 + $0x1f8] sm:$0xff]
    %v190 = vld [vmem:[#allocation5 + $0x200] sm:$0xff]
    %v191 = vld [vmem:[#allocation5 + $0x208] sm:$0xff]
    %v192 = vld [vmem:[#allocation5 + $0x210] sm:$0xff]
    %v193 = vld [vmem:[#allocation5 + $0x218] sm:$0xff]
    %v194 = vld [vmem:[#allocation5 + $0x220] sm:$0xff]
    %v195 = vld [vmem:[#allocation5 + $0x228] sm:$0xff]
    %v196 = vld [vmem:[#allocation5 + $0x230] sm:$0xff]
    %v197 = vld [vmem:[#allocation5 + $0x238] sm:$0xff]
    %v198 = vld [vmem:[#allocation5 + $0x240] sm:$0xff]
    %v199 = vld [vmem:[#allocation5 + $0x248] sm:$0xff]
    %v200 = vld [vmem:[#allocation5 + $0x250] sm:$0xff]
    %v201 = vld [vmem:[#allocation5 + $0x258] sm:$0xff]
    %v202 = vld [vmem:[#allocation5 + $0x260] sm:$0xff]
    %v203 = vld [vmem:[#allocation5 + $0x268] sm:$0xff]
    %v204 = vld [vmem:[#allocation5 + $0x270] sm:$0xff]
    %v205 = vld [vmem:[#allocation5 + $0x278] sm:$0xff]
    %v206 = vld [vmem:[#allocation5 + $0x280] sm:$0xff]
    %v207 = vld [vmem:[#allocation5 + $0x288] sm:$0xff]
    %v208 = vld [vmem:[#allocation5 + $0x290] sm:$0xff]
    %v209 = vld [vmem:[#allocation5 + $0x298] sm:$0xff]
    %v210 = vld [vmem:[#allocation5 + $0x2a0] sm:$0xff]
    %v211 = vld [vmem:[#allocation5 + $0x2a8] sm:$0xff]
    %v212 = vld [vmem:[#allocation5 + $0x2b0] sm:$0xff]
    %v213 = vld [vmem:[#allocation5 + $0x2b8] sm:$0xff]
    %v214 = vld [vmem:[#allocation5 + $0x2c0] sm:$0xff]
    %v215 = vld [vmem:[#allocation5 + $0x2c8] sm:$0xff]
    %v216 = vld [vmem:[#allocation5 + $0x2d0] sm:$0xff]
    %v217 = vld [vmem:[#allocation5 + $0x2d8] sm:$0xff]
    %v218 = vld [vmem:[#allocation5 + $0x2e0] sm:$0xff]
    %v219 = vld [vmem:[#allocation5 + $0x2e8] sm:$0xff]
    %v220 = vld [vmem:[#allocation5 + $0x2f0] sm:$0xff]
    %v221 = vld [vmem:[#allocation5 + $0x2f8] sm:$0xff]
    %v222 = vld [vmem:[#allocation5 + $0x300] sm:$0xff]
    %v223 = vld [vmem:[#allocation5 + $0x308] sm:$0xff]
    %v224 = vld [vmem:[#allocation5 + $0x310] sm:$0xff]
    %v225 = vld [vmem:[#allocation5 + $0x318] sm:$0xff]
    %v226 = vld [vmem:[#allocation5 + $0x320] sm:$0xff]
    %v227 = vld [vmem:[#allocation5 + $0x328] sm:$0xff]
    %v228 = vld [vmem:[#allocation5 + $0x330] sm:$0xff]
    %v229 = vld [vmem:[#allocation5 + $0x338] sm:$0xff]
    %v230 = vld [vmem:[#allocation5 + $0x340] sm:$0xff]
    %v231 = vld [vmem:[#allocation5 + $0x348] sm:$0xff]
    %v232 = vld [vmem:[#allocation5 + $0x350] sm:$0xff]
    %v233 = vld [vmem:[#allocation5 + $0x358] sm:$0xff]
    %v234 = vld [vmem:[#allocation5 + $0x360] sm:$0xff]
    %v235 = vld [vmem:[#allocation5 + $0x368] sm:$0xff]
    %v236 = vld [vmem:[#allocation5 + $0x370] sm:$0xff]
    %v237 = vld [vmem:[#allocation5 + $0x378] sm:$0xff]
    %v238 = vld [vmem:[#allocation5 + $0x380] sm:$0xff]
    %v239 = vld [vmem:[#allocation5 + $0x388] sm:$0xff]
    %v240 = vld [vmem:[#allocation5 + $0x390] sm:$0xff]
    %v241 = vld [vmem:[#allocation5 + $0x398] sm:$0xff]
    %v242 = vld [vmem:[#allocation5 + $0x3a0] sm:$0xff]
    %v243 = vld [vmem:[#allocation5 + $0x3a8] sm:$0xff]
    %v244 = vld [vmem:[#allocation5 + $0x3b0] sm:$0xff]
    %v245 = vld [vmem:[#allocation5 + $0x3b8] sm:$0xff]
    %v246 = vld [vmem:[#allocation5 + $0x3c0] sm:$0xff]
    %v247 = vld [vmem:[#allocation5 + $0x3c8] sm:$0xff]
    %v248 = vld [vmem:[#allocation5 + $0x3d0] sm:$0xff]
    %v249 = vld [vmem:[#allocation5 + $0x3d8] sm:$0xff]
    %v250 = vld [vmem:[#allocation5 + $0x3e0] sm:$0xff]
    %v251 = vld [vmem:[#allocation5 + $0x3e8] sm:$0xff]
    %v252 = vld [vmem:[#allocation5 + $0x3f0] sm:$0xff]
    %v253 = vld [vmem:[#allocation5 + $0x3f8] sm:$0xff]
    %v254 = vld [vmem:[%s2] sm:$0x3]
    %v256 = vlaneseq
    %v257 = vshrl.u32 %v256, 7
    %v258 = vsub.s32 0, %v257
    %v259 = vrot.slane %v254, %v258
    %v260 = vlaneseq
    %v261 = vshrl.u32 %v260, 7
    %v262 = vsub.s32 1, %v261
    %v263 = vrot.slane %v254, %v262
    %v394 = vunpack.c.l.b16 %v126
    %v395 = vunpack.c.h.b16 %v126
    %v396 = vunpack.c.l.b16 %v127
    %v397 = vunpack.c.h.b16 %v127
    %v398 = vunpack.c.l.b16 %v128
    %v399 = vunpack.c.h.b16 %v128
    %v400 = vunpack.c.l.b16 %v129
    %v401 = vunpack.c.h.b16 %v129
    %v402 = vunpack.c.l.b16 %v130
    %v403 = vunpack.c.h.b16 %v130
    %v404 = vunpack.c.l.b16 %v131
    %v405 = vunpack.c.h.b16 %v131
    %v406 = vunpack.c.l.b16 %v132
    %v407 = vunpack.c.h.b16 %v132
    %v408 = vunpack.c.l.b16 %v133
    %v409 = vunpack.c.h.b16 %v133
    %v410 = vunpack.c.l.b16 %v134
    %v411 = vunpack.c.h.b16 %v134
    %v412 = vunpack.c.l.b16 %v135
    %v413 = vunpack.c.h.b16 %v135
    %v414 = vunpack.c.l.b16 %v136
    %v415 = vunpack.c.h.b16 %v136
    %v416 = vunpack.c.l.b16 %v137
    %v417 = vunpack.c.h.b16 %v137
    %v418 = vunpack.c.l.b16 %v138
    %v419 = vunpack.c.h.b16 %v138
    %v420 = vunpack.c.l.b16 %v139
    %v421 = vunpack.c.h.b16 %v139
    %v422 = vunpack.c.l.b16 %v140
    %v423 = vunpack.c.h.b16 %v140
    %v424 = vunpack.c.l.b16 %v141
    %v425 = vunpack.c.h.b16 %v141
    %v426 = vunpack.c.l.b16 %v142
    %v427 = vunpack.c.h.b16 %v142
    %v428 = vunpack.c.l.b16 %v143
    %v429 = vunpack.c.h.b16 %v143
    %v430 = vunpack.c.l.b16 %v144
    %v431 = vunpack.c.h.b16 %v144
    %v432 = vunpack.c.l.b16 %v145
    %v433 = vunpack.c.h.b16 %v145
    %v434 = vunpack.c.l.b16 %v146
    %v435 = vunpack.c.h.b16 %v146
    %v436 = vunpack.c.l.b16 %v147
    %v437 = vunpack.c.h.b16 %v147
    %v438 = vunpack.c.l.b16 %v148
    %v439 = vunpack.c.h.b16 %v148
    %v440 = vunpack.c.l.b16 %v149
    %v441 = vunpack.c.h.b16 %v149
    %v442 = vunpack.c.l.b16 %v150
    %v443 = vunpack.c.h.b16 %v150
    %v444 = vunpack.c.l.b16 %v151
    %v445 = vunpack.c.h.b16 %v151
    %v446 = vunpack.c.l.b16 %v152
    %v447 = vunpack.c.h.b16 %v152
    %v448 = vunpack.c.l.b16 %v153
    %v449 = vunpack.c.h.b16 %v153
    %v450 = vunpack.c.l.b16 %v154
    %v451 = vunpack.c.h.b16 %v154
    %v452 = vunpack.c.l.b16 %v155
    %v453 = vunpack.c.h.b16 %v155
    %v454 = vunpack.c.l.b16 %v156
    %v455 = vunpack.c.h.b16 %v156
    %v456 = vunpack.c.l.b16 %v157
    %v457 = vunpack.c.h.b16 %v157
    %v458 = vunpack.c.l.b16 %v158
    %v459 = vunpack.c.h.b16 %v158
    %v460 = vunpack.c.l.b16 %v159
    %v461 = vunpack.c.h.b16 %v159
    %v462 = vunpack.c.l.b16 %v160
    %v463 = vunpack.c.h.b16 %v160
    %v464 = vunpack.c.l.b16 %v161
    %v465 = vunpack.c.h.b16 %v161
    %v466 = vunpack.c.l.b16 %v162
    %v467 = vunpack.c.h.b16 %v162
    %v468 = vunpack.c.l.b16 %v163
    %v469 = vunpack.c.h.b16 %v163
    %v470 = vunpack.c.l.b16 %v164
    %v471 = vunpack.c.h.b16 %v164
    %v472 = vunpack.c.l.b16 %v165
    %v473 = vunpack.c.h.b16 %v165
    %v474 = vunpack.c.l.b16 %v166
    %v475 = vunpack.c.h.b16 %v166
    %v476 = vunpack.c.l.b16 %v167
    %v477 = vunpack.c.h.b16 %v167
    %v478 = vunpack.c.l.b16 %v168
    %v479 = vunpack.c.h.b16 %v168
    %v480 = vunpack.c.l.b16 %v169
    %v481 = vunpack.c.h.b16 %v169
    %v482 = vunpack.c.l.b16 %v170
    %v483 = vunpack.c.h.b16 %v170
    %v484 = vunpack.c.l.b16 %v171
    %v485 = vunpack.c.h.b16 %v171
    %v486 = vunpack.c.l.b16 %v172
    %v487 = vunpack.c.h.b16 %v172
    %v488 = vunpack.c.l.b16 %v173
    %v489 = vunpack.c.h.b16 %v173
    %v490 = vunpack.c.l.b16 %v174
    %v491 = vunpack.c.h.b16 %v174
    %v492 = vunpack.c.l.b16 %v175
    %v493 = vunpack.c.h.b16 %v175
    %v494 = vunpack.c.l.b16 %v176
    %v495 = vunpack.c.h.b16 %v176
    %v496 = vunpack.c.l.b16 %v177
    %v497 = vunpack.c.h.b16 %v177
    %v498 = vunpack.c.l.b16 %v178
    %v499 = vunpack.c.h.b16 %v178
    %v500 = vunpack.c.l.b16 %v179
    %v501 = vunpack.c.h.b16 %v179
    %v502 = vunpack.c.l.b16 %v180
    %v503 = vunpack.c.h.b16 %v180
    %v504 = vunpack.c.l.b16 %v181
    %v505 = vunpack.c.h.b16 %v181
    %v506 = vunpack.c.l.b16 %v182
    %v507 = vunpack.c.h.b16 %v182
    %v508 = vunpack.c.l.b16 %v183
    %v509 = vunpack.c.h.b16 %v183
    %v510 = vunpack.c.l.b16 %v184
    %v511 = vunpack.c.h.b16 %v184
    %v512 = vunpack.c.l.b16 %v185
    %v513 = vunpack.c.h.b16 %v185
    %v514 = vunpack.c.l.b16 %v186
    %v515 = vunpack.c.h.b16 %v186
    %v516 = vunpack.c.l.b16 %v187
    %v517 = vunpack.c.h.b16 %v187
    %v518 = vunpack.c.l.b16 %v188
    %v519 = vunpack.c.h.b16 %v188
    %v520 = vunpack.c.l.b16 %v189
    %v521 = vunpack.c.h.b16 %v189
    %v522 = vunpack.c.l.b16 %v190
    %v523 = vunpack.c.h.b16 %v190
    %v524 = vunpack.c.l.b16 %v191
    %v525 = vunpack.c.h.b16 %v191
    %v526 = vunpack.c.l.b16 %v192
    %v527 = vunpack.c.h.b16 %v192
    %v528 = vunpack.c.l.b16 %v193
    %v529 = vunpack.c.h.b16 %v193
    %v530 = vunpack.c.l.b16 %v194
    %v531 = vunpack.c.h.b16 %v194
    %v532 = vunpack.c.l.b16 %v195
    %v533 = vunpack.c.h.b16 %v195
    %v534 = vunpack.c.l.b16 %v196
    %v535 = vunpack.c.h.b16 %v196
    %v536 = vunpack.c.l.b16 %v197
    %v537 = vunpack.c.h.b16 %v197
    %v538 = vunpack.c.l.b16 %v198
    %v539 = vunpack.c.h.b16 %v198
    %v540 = vunpack.c.l.b16 %v199
    %v541 = vunpack.c.h.b16 %v199
    %v542 = vunpack.c.l.b16 %v200
    %v543 = vunpack.c.h.b16 %v200
    %v544 = vunpack.c.l.b16 %v201
    %v545 = vunpack.c.h.b16 %v201
    %v546 = vunpack.c.l.b16 %v202
    %v547 = vunpack.c.h.b16 %v202
    %v548 = vunpack.c.l.b16 %v203
    %v549 = vunpack.c.h.b16 %v203
    %v550 = vunpack.c.l.b16 %v204
    %v551 = vunpack.c.h.b16 %v204
    %v552 = vunpack.c.l.b16 %v205
    %v553 = vunpack.c.h.b16 %v205
    %v554 = vunpack.c.l.b16 %v206
    %v555 = vunpack.c.h.b16 %v206
    %v556 = vunpack.c.l.b16 %v207
    %v557 = vunpack.c.h.b16 %v207
    %v558 = vunpack.c.l.b16 %v208
    %v559 = vunpack.c.h.b16 %v208
    %v560 = vunpack.c.l.b16 %v209
    %v561 = vunpack.c.h.b16 %v209
    %v562 = vunpack.c.l.b16 %v210
    %v563 = vunpack.c.h.b16 %v210
    %v564 = vunpack.c.l.b16 %v211
    %v565 = vunpack.c.h.b16 %v211
    %v566 = vunpack.c.l.b16 %v212
    %v567 = vunpack.c.h.b16 %v212
    %v568 = vunpack.c.l.b16 %v213
    %v569 = vunpack.c.h.b16 %v213
    %v570 = vunpack.c.l.b16 %v214
    %v571 = vunpack.c.h.b16 %v214
    %v572 = vunpack.c.l.b16 %v215
    %v573 = vunpack.c.h.b16 %v215
    %v574 = vunpack.c.l.b16 %v216
    %v575 = vunpack.c.h.b16 %v216
    %v576 = vunpack.c.l.b16 %v217
    %v577 = vunpack.c.h.b16 %v217
    %v578 = vunpack.c.l.b16 %v218
    %v579 = vunpack.c.h.b16 %v218
    %v580 = vunpack.c.l.b16 %v219
    %v581 = vunpack.c.h.b16 %v219
    %v582 = vunpack.c.l.b16 %v220
    %v583 = vunpack.c.h.b16 %v220
    %v584 = vunpack.c.l.b16 %v221
    %v585 = vunpack.c.h.b16 %v221
    %v586 = vunpack.c.l.b16 %v222
    %v587 = vunpack.c.h.b16 %v222
    %v588 = vunpack.c.l.b16 %v223
    %v589 = vunpack.c.h.b16 %v223
    %v590 = vunpack.c.l.b16 %v224
    %v591 = vunpack.c.h.b16 %v224
    %v592 = vunpack.c.l.b16 %v225
    %v593 = vunpack.c.h.b16 %v225
    %v594 = vunpack.c.l.b16 %v226
    %v595 = vunpack.c.h.b16 %v226
    %v596 = vunpack.c.l.b16 %v227
    %v597 = vunpack.c.h.b16 %v227
    %v598 = vunpack.c.l.b16 %v228
    %v599 = vunpack.c.h.b16 %v228
    %v600 = vunpack.c.l.b16 %v229
    %v601 = vunpack.c.h.b16 %v229
    %v602 = vunpack.c.l.b16 %v230
    %v603 = vunpack.c.h.b16 %v230
    %v604 = vunpack.c.l.b16 %v231
    %v605 = vunpack.c.h.b16 %v231
    %v606 = vunpack.c.l.b16 %v232
    %v607 = vunpack.c.h.b16 %v232
    %v608 = vunpack.c.l.b16 %v233
    %v609 = vunpack.c.h.b16 %v233
    %v610 = vunpack.c.l.b16 %v234
    %v611 = vunpack.c.h.b16 %v234
    %v612 = vunpack.c.l.b16 %v235
    %v613 = vunpack.c.h.b16 %v235
    %v614 = vunpack.c.l.b16 %v236
    %v615 = vunpack.c.h.b16 %v236
    %v616 = vunpack.c.l.b16 %v237
    %v617 = vunpack.c.h.b16 %v237
    %v618 = vunpack.c.l.b16 %v238
    %v619 = vunpack.c.h.b16 %v238
    %v620 = vunpack.c.l.b16 %v239
    %v621 = vunpack.c.h.b16 %v239
    %v622 = vunpack.c.l.b16 %v240
    %v623 = vunpack.c.h.b16 %v240
    %v624 = vunpack.c.l.b16 %v241
    %v625 = vunpack.c.h.b16 %v241
    %v626 = vunpack.c.l.b16 %v242
    %v627 = vunpack.c.h.b16 %v242
    %v628 = vunpack.c.l.b16 %v243
    %v629 = vunpack.c.h.b16 %v243
    %v630 = vunpack.c.l.b16 %v244
    %v631 = vunpack.c.h.b16 %v244
    %v632 = vunpack.c.l.b16 %v245
    %v633 = vunpack.c.h.b16 %v245
    %v634 = vunpack.c.l.b16 %v246
    %v635 = vunpack.c.h.b16 %v246
    %v636 = vunpack.c.l.b16 %v247
    %v637 = vunpack.c.h.b16 %v247
    %v638 = vunpack.c.l.b16 %v248
    %v639 = vunpack.c.h.b16 %v248
    %v640 = vunpack.c.l.b16 %v249
    %v641 = vunpack.c.h.b16 %v249
    %v642 = vunpack.c.l.b16 %v250
    %v643 = vunpack.c.h.b16 %v250
    %v644 = vunpack.c.l.b16 %v251
    %v645 = vunpack.c.h.b16 %v251
    %v646 = vunpack.c.l.b16 %v252
    %v647 = vunpack.c.h.b16 %v252
    %v648 = vunpack.c.l.b16 %v253
    %v649 = vunpack.c.h.b16 %v253
    %v650 = vpack.c.b16 %v396, %v394
    %v651 = vpack.c.b16 %v397, %v395
    %v652 = vpack.c.b16 %v400, %v398
    %v653 = vpack.c.b16 %v401, %v399
    %v654 = vpack.c.b16 %v404, %v402
    %v655 = vpack.c.b16 %v405, %v403
    %v656 = vpack.c.b16 %v408, %v406
    %v657 = vpack.c.b16 %v409, %v407
    %v658 = vpack.c.b16 %v412, %v410
    %v659 = vpack.c.b16 %v413, %v411
    %v660 = vpack.c.b16 %v416, %v414
    %v661 = vpack.c.b16 %v417, %v415
    %v662 = vpack.c.b16 %v420, %v418
    %v663 = vpack.c.b16 %v421, %v419
    %v664 = vpack.c.b16 %v424, %v422
    %v665 = vpack.c.b16 %v425, %v423
    %v666 = vpack.c.b16 %v428, %v426
    %v667 = vpack.c.b16 %v429, %v427
    %v668 = vpack.c.b16 %v432, %v430
    %v669 = vpack.c.b16 %v433, %v431
    %v670 = vpack.c.b16 %v436, %v434
    %v671 = vpack.c.b16 %v437, %v435
    %v672 = vpack.c.b16 %v440, %v438
    %v673 = vpack.c.b16 %v441, %v439
    %v674 = vpack.c.b16 %v444, %v442
    %v675 = vpack.c.b16 %v445, %v443
    %v676 = vpack.c.b16 %v448, %v446
    %v677 = vpack.c.b16 %v449, %v447
    %v678 = vpack.c.b16 %v452, %v450
    %v679 = vpack.c.b16 %v453, %v451
    %v680 = vpack.c.b16 %v456, %v454
    %v681 = vpack.c.b16 %v457, %v455
    %v682 = vpack.c.b16 %v460, %v458
    %v683 = vpack.c.b16 %v461, %v459
    %v684 = vpack.c.b16 %v464, %v462
    %v685 = vpack.c.b16 %v465, %v463
    %v686 = vpack.c.b16 %v468, %v466
    %v687 = vpack.c.b16 %v469, %v467
    %v688 = vpack.c.b16 %v472, %v470
    %v689 = vpack.c.b16 %v473, %v471
    %v690 = vpack.c.b16 %v476, %v474
    %v691 = vpack.c.b16 %v477, %v475
    %v692 = vpack.c.b16 %v480, %v478
    %v693 = vpack.c.b16 %v481, %v479
    %v694 = vpack.c.b16 %v484, %v482
    %v695 = vpack.c.b16 %v485, %v483
    %v696 = vpack.c.b16 %v488, %v486
    %v697 = vpack.c.b16 %v489, %v487
    %v698 = vpack.c.b16 %v492, %v490
    %v699 = vpack.c.b16 %v493, %v491
    %v700 = vpack.c.b16 %v496, %v494
    %v701 = vpack.c.b16 %v497, %v495
    %v702 = vpack.c.b16 %v500, %v498
    %v703 = vpack.c.b16 %v501, %v499
    %v704 = vpack.c.b16 %v504, %v502
    %v705 = vpack.c.b16 %v505, %v503
    %v706 = vpack.c.b16 %v508, %v506
    %v707 = vpack.c.b16 %v509, %v507
    %v708 = vpack.c.b16 %v512, %v510
    %v709 = vpack.c.b16 %v513, %v511
    %v710 = vpack.c.b16 %v516, %v514
    %v711 = vpack.c.b16 %v517, %v515
    %v712 = vpack.c.b16 %v520, %v518
    %v713 = vpack.c.b16 %v521, %v519
    %v714 = vpack.c.b16 %v524, %v522
    %v715 = vpack.c.b16 %v525, %v523
    %v716 = vpack.c.b16 %v528, %v526
    %v717 = vpack.c.b16 %v529, %v527
    %v718 = vpack.c.b16 %v532, %v530
    %v719 = vpack.c.b16 %v533, %v531
    %v720 = vpack.c.b16 %v536, %v534
    %v721 = vpack.c.b16 %v537, %v535
    %v722 = vpack.c.b16 %v540, %v538
    %v723 = vpack.c.b16 %v541, %v539
    %v724 = vpack.c.b16 %v544, %v542
    %v725 = vpack.c.b16 %v545, %v543
    %v726 = vpack.c.b16 %v548, %v546
    %v727 = vpack.c.b16 %v549, %v547
    %v728 = vpack.c.b16 %v552, %v550
    %v729 = vpack.c.b16 %v553, %v551
    %v730 = vpack.c.b16 %v556, %v554
    %v731 = vpack.c.b16 %v557, %v555
    %v732 = vpack.c.b16 %v560, %v558
    %v733 = vpack.c.b16 %v561, %v559
    %v734 = vpack.c.b16 %v564, %v562
    %v735 = vpack.c.b16 %v565, %v563
    %v736 = vpack.c.b16 %v568, %v566
    %v737 = vpack.c.b16 %v569, %v567
    %v738 = vpack.c.b16 %v572, %v570
    %v739 = vpack.c.b16 %v573, %v571
    %v740 = vpack.c.b16 %v576, %v574
    %v741 = vpack.c.b16 %v577, %v575
    %v742 = vpack.c.b16 %v580, %v578
    %v743 = vpack.c.b16 %v581, %v579
    %v744 = vpack.c.b16 %v584, %v582
    %v745 = vpack.c.b16 %v585, %v583
    %v746 = vpack.c.b16 %v588, %v586
    %v747 = vpack.c.b16 %v589, %v587
    %v748 = vpack.c.b16 %v592, %v590
    %v749 = vpack.c.b16 %v593, %v591
    %v750 = vpack.c.b16 %v596, %v594
    %v751 = vpack.c.b16 %v597, %v595
    %v752 = vpack.c.b16 %v600, %v598
    %v753 = vpack.c.b16 %v601, %v599
    %v754 = vpack.c.b16 %v604, %v602
    %v755 = vpack.c.b16 %v605, %v603
    %v756 = vpack.c.b16 %v608, %v606
    %v757 = vpack.c.b16 %v609, %v607
    %v758 = vpack.c.b16 %v612, %v610
    %v759 = vpack.c.b16 %v613, %v611
    %v760 = vpack.c.b16 %v616, %v614
    %v761 = vpack.c.b16 %v617, %v615
    %v762 = vpack.c.b16 %v620, %v618
    %v763 = vpack.c.b16 %v621, %v619
    %v764 = vpack.c.b16 %v624, %v622
    %v765 = vpack.c.b16 %v625, %v623
    %v766 = vpack.c.b16 %v628, %v626
    %v767 = vpack.c.b16 %v629, %v627
    %v768 = vpack.c.b16 %v632, %v630
    %v769 = vpack.c.b16 %v633, %v631
    %v770 = vpack.c.b16 %v636, %v634
    %v771 = vpack.c.b16 %v637, %v635
    %v772 = vpack.c.b16 %v640, %v638
    %v773 = vpack.c.b16 %v641, %v639
    %v774 = vpack.c.b16 %v644, %v642
    %v775 = vpack.c.b16 %v645, %v643
    %v776 = vpack.c.b16 %v648, %v646
    %v777 = vpack.c.b16 %v649, %v647
    %906 = vmatprep.subr.bf16.mxu0 %v651
    %907 = vmatpush1.bf16.msra.mxu0 %v650
    %908 = vmatprep.subr.bf16.mxu0 %v653
    %909 = vmatpush1.bf16.msra.mxu0 %v652
    %910 = vmatprep.subr.bf16.mxu0 %v655
    %911 = vmatpush1.bf16.msra.mxu0 %v654
    %912 = vmatprep.subr.bf16.mxu0 %v657
    %913 = vmatpush1.bf16.msra.mxu0 %v656
    %914 = vmatprep.subr.bf16.mxu0 %v659
    %915 = vmatpush1.bf16.msra.mxu0 %v658
    %916 = vmatprep.subr.bf16.mxu0 %v661
    %917 = vmatpush1.bf16.msra.mxu0 %v660
    %918 = vmatprep.subr.bf16.mxu0 %v663
    %919 = vmatpush1.bf16.msra.mxu0 %v662
    %920 = vmatprep.subr.bf16.mxu0 %v665
    %921 = vmatpush1.bf16.msra.mxu0 %v664
    %922 = vmatprep.subr.bf16.mxu0 %v667
    %923 = vmatpush1.bf16.msra.mxu0 %v666
    %924 = vmatprep.subr.bf16.mxu0 %v669
    %925 = vmatpush1.bf16.msra.mxu0 %v668
    %926 = vmatprep.subr.bf16.mxu0 %v671
    %927 = vmatpush1.bf16.msra.mxu0 %v670
    %928 = vmatprep.subr.bf16.mxu0 %v673
    %929 = vmatpush1.bf16.msra.mxu0 %v672
    %930 = vmatprep.subr.bf16.mxu0 %v675
    %931 = vmatpush1.bf16.msra.mxu0 %v674
    %932 = vmatprep.subr.bf16.mxu0 %v677
    %933 = vmatpush1.bf16.msra.mxu0 %v676
    %934 = vmatprep.subr.bf16.mxu0 %v679
    %935 = vmatpush1.bf16.msra.mxu0 %v678
    %936 = vmatprep.subr.bf16.mxu0 %v681
    %937 = vmatpush1.bf16.msra.mxu0 %v680
    %938 = vmatprep.mubr.bf16.mxu0 %v119
    %939 = vmatmul.mubr.bf16.gmra.mrb[0].mxu0 %v118
    %v940 = vpop.f32.mrb[0].mxu0
    %v941 = vadd.f32 %v259, %v940
    %v942 = vpop.f32.mrb[0].mxu0
    %v943 = vadd.f32 %v263, %v942
    %v944 = vpop.f32.mrb[0].mxu0
    %v945 = vadd.f32 %v259, %v944
    %v946 = vpop.f32.mrb[0].mxu0
    %v947 = vadd.f32 %v263, %v946
    %948 = vdwg.mxu0
    %949 = vmatprep.subr.bf16.mxu0 %v683
    %950 = vmatpush1.bf16.msra.mxu0 %v682
    %951 = vmatprep.subr.bf16.mxu0 %v685
    %952 = vmatpush1.bf16.msra.mxu0 %v684
    %953 = vmatprep.subr.bf16.mxu0 %v687
    %954 = vmatpush1.bf16.msra.mxu0 %v686
    %955 = vmatprep.subr.bf16.mxu0 %v689
    %956 = vmatpush1.bf16.msra.mxu0 %v688
    %957 = vmatprep.subr.bf16.mxu0 %v691
    %958 = vmatpush1.bf16.msra.mxu0 %v690
    %959 = vmatprep.subr.bf16.mxu0 %v693
    %960 = vmatpush1.bf16.msra.mxu0 %v692
    %961 = vmatprep.subr.bf16.mxu0 %v695
    %962 = vmatpush1.bf16.msra.mxu0 %v694
    %963 = vmatprep.subr.bf16.mxu0 %v697
    %964 = vmatpush1.bf16.msra.mxu0 %v696
    %965 = vmatprep.subr.bf16.mxu0 %v699
    %966 = vmatpush1.bf16.msra.mxu0 %v698
    %967 = vmatprep.subr.bf16.mxu0 %v701
    %968 = vmatpush1.bf16.msra.mxu0 %v700
    %969 = vmatprep.subr.bf16.mxu0 %v703
    %970 = vmatpush1.bf16.msra.mxu0 %v702
    %971 = vmatprep.subr.bf16.mxu0 %v705
    %972 = vmatpush1.bf16.msra.mxu0 %v704
    %973 = vmatprep.subr.bf16.mxu0 %v707
    %974 = vmatpush1.bf16.msra.mxu0 %v706
    %975 = vmatprep.subr.bf16.mxu0 %v709
    %976 = vmatpush1.bf16.msra.mxu0 %v708
    %977 = vmatprep.subr.bf16.mxu0 %v711
    %978 = vmatpush1.bf16.msra.mxu0 %v710
    %979 = vmatprep.subr.bf16.mxu0 %v713
    %980 = vmatpush1.bf16.msra.mxu0 %v712
    %981 = vmatprep.mubr.bf16.mxu0 %v121
    %982 = vmatmul.mubr.bf16.gmra.mrb[0].mxu0 %v120
    %v983 = vpop.f32.mrb[0].mxu0
    %v984 = vadd.f32 %v941, %v983
    %v985 = vpop.f32.mrb[0].mxu0
    %v986 = vadd.f32 %v943, %v985
    %v987 = vpop.f32.mrb[0].mxu0
    %v988 = vadd.f32 %v945, %v987
    %v989 = vpop.f32.mrb[0].mxu0
    %v990 = vadd.f32 %v947, %v989
    %991 = vdwg.mxu0
    %992 = vmatprep.subr.bf16.mxu0 %v715
    %993 = vmatpush1.bf16.msra.mxu0 %v714
    %994 = vmatprep.subr.bf16.mxu0 %v717
    %995 = vmatpush1.bf16.msra.mxu0 %v716
    %996 = vmatprep.subr.bf16.mxu0 %v719
    %997 = vmatpush1.bf16.msra.mxu0 %v718
    %998 = vmatprep.subr.bf16.mxu0 %v721
    %999 = vmatpush1.bf16.msra.mxu0 %v720
    %1000 = vmatprep.subr.bf16.mxu0 %v723
    %1001 = vmatpush1.bf16.msra.mxu0 %v722
    %1002 = vmatprep.subr.bf16.mxu0 %v725
    %1003 = vmatpush1.bf16.msra.mxu0 %v724
    %1004 = vmatprep.subr.bf16.mxu0 %v727
    %1005 = vmatpush1.bf16.msra.mxu0 %v726
    %1006 = vmatprep.subr.bf16.mxu0 %v729
    %1007 = vmatpush1.bf16.msra.mxu0 %v728
    %1008 = vmatprep.subr.bf16.mxu0 %v731
    %1009 = vmatpush1.bf16.msra.mxu0 %v730
    %1010 = vmatprep.subr.bf16.mxu0 %v733
    %1011 = vmatpush1.bf16.msra.mxu0 %v732
    %1012 = vmatprep.subr.bf16.mxu0 %v735
    %1013 = vmatpush1.bf16.msra.mxu0 %v734
    %1014 = vmatprep.subr.bf16.mxu0 %v737
    %1015 = vmatpush1.bf16.msra.mxu0 %v736
    %1016 = vmatprep.subr.bf16.mxu0 %v739
    %1017 = vmatpush1.bf16.msra.mxu0 %v738
    %1018 = vmatprep.subr.bf16.mxu0 %v741
    %1019 = vmatpush1.bf16.msra.mxu0 %v740
    %1020 = vmatprep.subr.bf16.mxu0 %v743
    %1021 = vmatpush1.bf16.msra.mxu0 %v742
    %1022 = vmatprep.subr.bf16.mxu0 %v745
    %1023 = vmatpush1.bf16.msra.mxu0 %v744
    %1024 = vmatprep.mubr.bf16.mxu0 %v123
    %1025 = vmatmul.mubr.bf16.gmra.mrb[0].mxu0 %v122
    %v1026 = vpop.f32.mrb[0].mxu0
    %v1027 = vadd.f32 %v984, %v1026
    %v1028 = vpop.f32.mrb[0].mxu0
    %v1029 = vadd.f32 %v986, %v1028
    %v1030 = vpop.f32.mrb[0].mxu0
    %v1031 = vadd.f32 %v988, %v1030
    %v1032 = vpop.f32.mrb[0].mxu0
    %v1033 = vadd.f32 %v990, %v1032
    %1034 = vdwg.mxu0
    %1035 = vmatprep.subr.bf16.mxu0 %v747
    %1036 = vmatpush1.bf16.msra.mxu0 %v746
    %1037 = vmatprep.subr.bf16.mxu0 %v749
    %1038 = vmatpush1.bf16.msra.mxu0 %v748
    %1039 = vmatprep.subr.bf16.mxu0 %v751
    %1040 = vmatpush1.bf16.msra.mxu0 %v750
    %1041 = vmatprep.subr.bf16.mxu0 %v753
    %1042 = vmatpush1.bf16.msra.mxu0 %v752
    %1043 = vmatprep.subr.bf16.mxu0 %v755
    %1044 = vmatpush1.bf16.msra.mxu0 %v754
    %1045 = vmatprep.subr.bf16.mxu0 %v757
    %1046 = vmatpush1.bf16.msra.mxu0 %v756
    %1047 = vmatprep.subr.bf16.mxu0 %v759
    %1048 = vmatpush1.bf16.msra.mxu0 %v758
    %1049 = vmatprep.subr.bf16.mxu0 %v761
    %1050 = vmatpush1.bf16.msra.mxu0 %v760
    %1051 = vmatprep.subr.bf16.mxu0 %v763
    %1052 = vmatpush1.bf16.msra.mxu0 %v762
    %1053 = vmatprep.subr.bf16.mxu0 %v765
    %1054 = vmatpush1.bf16.msra.mxu0 %v764
    %1055 = vmatprep.subr.bf16.mxu0 %v767
    %1056 = vmatpush1.bf16.msra.mxu0 %v766
    %1057 = vmatprep.subr.bf16.mxu0 %v769
    %1058 = vmatpush1.bf16.msra.mxu0 %v768
    %1059 = vmatprep.subr.bf16.mxu0 %v771
    %1060 = vmatpush1.bf16.msra.mxu0 %v770
    %1061 = vmatprep.subr.bf16.mxu0 %v773
    %1062 = vmatpush1.bf16.msra.mxu0 %v772
    %1063 = vmatprep.subr.bf16.mxu0 %v775
    %1064 = vmatpush1.bf16.msra.mxu0 %v774
    %1065 = vmatprep.subr.bf16.mxu0 %v777
    %1066 = vmatpush1.bf16.msra.mxu0 %v776
    %1067 = vmatprep.mubr.bf16.mxu0 %v125
    %1068 = vmatmul.mubr.bf16.gmra.mrb[0].mxu0 %v124
    %v1069 = vpop.f32.mrb[0].mxu0
    %v1070 = vadd.f32 %v1027, %v1069
    %v1071 = vpop.f32.mrb[0].mxu0
    %v1072 = vadd.f32 %v1029, %v1071
    %v1073 = vpop.f32.mrb[0].mxu0
    %v1074 = vadd.f32 %v1031, %v1073
    %v1075 = vpop.f32.mrb[0].mxu0
    %v1076 = vadd.f32 %v1033, %v1075
    %1077 = vdwg.mxu0
    %vm1078 = vcmp.ge.f32.partialorder %v1070, 0.0
    %vm1079 = vcmp.ge.f32.partialorder %v1072, 0.0
    %vm1080 = vcmp.ge.f32.partialorder %v1074, 0.0
    %vm1081 = vcmp.ge.f32.partialorder %v1076, 0.0
    %v1082 = vmul.f32 %v1070, 0.1
    %v1083 = vmul.f32 %v1072, 0.1
    %v1084 = vmul.f32 %v1074, 0.1
    %v1085 = vmul.f32 %v1076, 0.1
    %v1086 = vsel %vm1078, %v1070, %v1082
    %v1087 = vsel %vm1079, %v1072, %v1083
    %v1088 = vsel %vm1080, %v1074, %v1084
    %v1089 = vsel %vm1081, %v1076, %v1085
    %v1090 = vpack.c.bf16 %v1088, %v1086
    %v1091 = vpack.c.bf16 %v1089, %v1087
    %v1092 = vld [vmem:[#allocation7] sm:$0xf]
    %v1093 = vld [vmem:[#allocation7 + $0x4] sm:$0xf]
    %v1094 = vld [vmem:[#allocation7 + $0x8] sm:$0xf]
    %v1095 = vld [vmem:[#allocation7 + $0xc] sm:$0xf]
    %v1096 = vld [vmem:[#allocation7 + $0x10] sm:$0xf]
    %v1097 = vld [vmem:[#allocation7 + $0x14] sm:$0xf]
    %v1098 = vld [vmem:[#allocation7 + $0x18] sm:$0xf]
    %v1099 = vld [vmem:[#allocation7 + $0x1c] sm:$0xf]
    %v1100 = vld [vmem:[#allocation7 + $0x20] sm:$0xf]
    %v1101 = vld [vmem:[#allocation7 + $0x24] sm:$0xf]
    %v1102 = vld [vmem:[#allocation7 + $0x28] sm:$0xf]
    %v1103 = vld [vmem:[#allocation7 + $0x2c] sm:$0xf]
    %v1104 = vld [vmem:[#allocation7 + $0x30] sm:$0xf]
    %v1105 = vld [vmem:[#allocation7 + $0x34] sm:$0xf]
    %v1106 = vld [vmem:[#allocation7 + $0x38] sm:$0xf]
    %v1107 = vld [vmem:[#allocation7 + $0x3c] sm:$0xf]
    %v1108 = vld [vmem:[#allocation7 + $0x40] sm:$0xf]
    %v1109 = vld [vmem:[#allocation7 + $0x44] sm:$0xf]
    %v1110 = vld [vmem:[#allocation7 + $0x48] sm:$0xf]
    %v1111 = vld [vmem:[#allocation7 + $0x4c] sm:$0xf]
    %v1112 = vld [vmem:[#allocation7 + $0x50] sm:$0xf]
    %v1113 = vld [vmem:[#allocation7 + $0x54] sm:$0xf]
    %v1114 = vld [vmem:[#allocation7 + $0x58] sm:$0xf]
    %v1115 = vld [vmem:[#allocation7 + $0x5c] sm:$0xf]
    %v1116 = vld [vmem:[#allocation7 + $0x60] sm:$0xf]
    %v1117 = vld [vmem:[#allocation7 + $0x64] sm:$0xf]
    %v1118 = vld [vmem:[#allocation7 + $0x68] sm:$0xf]
    %v1119 = vld [vmem:[#allocation7 + $0x6c] sm:$0xf]
    %v1120 = vld [vmem:[#allocation7 + $0x70] sm:$0xf]
    %v1121 = vld [vmem:[#allocation7 + $0x74] sm:$0xf]
    %v1122 = vld [vmem:[#allocation7 + $0x78] sm:$0xf]
    %v1123 = vld [vmem:[#allocation7 + $0x7c] sm:$0xf]
    %v1124 = vld [vmem:[%s4] sm:$0x1]
    %v1126 = vlaneseq
    %v1127 = vshrl.u32 %v1126, 7
    %v1128 = vsub.s32 0, %v1127
    %v1129 = vrot.slane %v1124, %v1128
    %v1163 = vunpack.c.l.b16 %v1092
    %v1164 = vunpack.c.l.b16 %v1093
    %v1165 = vunpack.c.l.b16 %v1094
    %v1166 = vunpack.c.l.b16 %v1095
    %v1167 = vunpack.c.l.b16 %v1096
    %v1168 = vunpack.c.l.b16 %v1097
    %v1169 = vunpack.c.l.b16 %v1098
    %v1170 = vunpack.c.l.b16 %v1099
    %v1171 = vunpack.c.l.b16 %v1100
    %v1172 = vunpack.c.l.b16 %v1101
    %v1173 = vunpack.c.l.b16 %v1102
    %v1174 = vunpack.c.l.b16 %v1103
    %v1175 = vunpack.c.l.b16 %v1104
    %v1176 = vunpack.c.l.b16 %v1105
    %v1177 = vunpack.c.l.b16 %v1106
    %v1178 = vunpack.c.l.b16 %v1107
    %v1179 = vunpack.c.l.b16 %v1108
    %v1180 = vunpack.c.l.b16 %v1109
    %v1181 = vunpack.c.l.b16 %v1110
    %v1182 = vunpack.c.l.b16 %v1111
    %v1183 = vunpack.c.l.b16 %v1112
    %v1184 = vunpack.c.l.b16 %v1113
    %v1185 = vunpack.c.l.b16 %v1114
    %v1186 = vunpack.c.l.b16 %v1115
    %v1187 = vunpack.c.l.b16 %v1116
    %v1188 = vunpack.c.l.b16 %v1117
    %v1189 = vunpack.c.l.b16 %v1118
    %v1190 = vunpack.c.l.b16 %v1119
    %v1191 = vunpack.c.l.b16 %v1120
    %v1192 = vunpack.c.l.b16 %v1121
    %v1193 = vunpack.c.l.b16 %v1122
    %v1194 = vunpack.c.l.b16 %v1123
    %v1195 = vpack.c.b16 %v1164, %v1163
    %v1196 = vpack.c.b16 %v1166, %v1165
    %v1197 = vpack.c.b16 %v1168, %v1167
    %v1198 = vpack.c.b16 %v1170, %v1169
    %v1199 = vpack.c.b16 %v1172, %v1171
    %v1200 = vpack.c.b16 %v1174, %v1173
    %v1201 = vpack.c.b16 %v1176, %v1175
    %v1202 = vpack.c.b16 %v1178, %v1177
    %v1203 = vpack.c.b16 %v1180, %v1179
    %v1204 = vpack.c.b16 %v1182, %v1181
    %v1205 = vpack.c.b16 %v1184, %v1183
    %v1206 = vpack.c.b16 %v1186, %v1185
    %v1207 = vpack.c.b16 %v1188, %v1187
    %v1208 = vpack.c.b16 %v1190, %v1189
    %v1209 = vpack.c.b16 %v1192, %v1191
    %v1210 = vpack.c.b16 %v1194, %v1193
    %1227 = vmatprep.subr.bf16.mxu0 0
    %1228 = vmatpush1.bf16.msra.mxu0 %v1195
    %1229 = vmatprep.subr.bf16.mxu0 0
    %1230 = vmatpush1.bf16.msra.mxu0 %v1196
    %1231 = vmatprep.subr.bf16.mxu0 0
    %1232 = vmatpush1.bf16.msra.mxu0 %v1197
    %1233 = vmatprep.subr.bf16.mxu0 0
    %1234 = vmatpush1.bf16.msra.mxu0 %v1198
    %1235 = vmatprep.subr.bf16.mxu0 0
    %1236 = vmatpush1.bf16.msra.mxu0 %v1199
    %1237 = vmatprep.subr.bf16.mxu0 0
    %1238 = vmatpush1.bf16.msra.mxu0 %v1200
    %1239 = vmatprep.subr.bf16.mxu0 0
    %1240 = vmatpush1.bf16.msra.mxu0 %v1201
    %1241 = vmatprep.subr.bf16.mxu0 0
    %1242 = vmatpush1.bf16.msra.mxu0 %v1202
    %1243 = vmatprep.subr.bf16.mxu0 0
    %1244 = vmatpush1.bf16.msra.mxu0 %v1203
    %1245 = vmatprep.subr.bf16.mxu0 0
    %1246 = vmatpush1.bf16.msra.mxu0 %v1204
    %1247 = vmatprep.subr.bf16.mxu0 0
    %1248 = vmatpush1.bf16.msra.mxu0 %v1205
    %1249 = vmatprep.subr.bf16.mxu0 0
    %1250 = vmatpush1.bf16.msra.mxu0 %v1206
    %1251 = vmatprep.subr.bf16.mxu0 0
    %1252 = vmatpush1.bf16.msra.mxu0 %v1207
    %1253 = vmatprep.subr.bf16.mxu0 0
    %1254 = vmatpush1.bf16.msra.mxu0 %v1208
    %1255 = vmatprep.subr.bf16.mxu0 0
    %1256 = vmatpush1.bf16.msra.mxu0 %v1209
    %1257 = vmatprep.subr.bf16.mxu0 0
    %1258 = vmatpush1.bf16.msra.mxu0 %v1210
    %1259 = vmatprep.mubr.bf16.mxu0 %v1091
    %1260 = vmatmul.mubr.bf16.gmra.mrb[0].mxu0 %v1090
    %v1261 = vpop.f32.mrb[0].mxu0
    %v1262 = vadd.f32 %v1129, %v1261
    %v1263 = vpop.f32.mrb[0].mxu0
    %v1264 = vpop.f32.mrb[0].mxu0
    %v1265 = vadd.f32 %v1129, %v1264
    %v1266 = vpop.f32.mrb[0].mxu0
    %1267 = vdwg.mxu0
    %vm1268 = vcmp.ge.f32.partialorder %v1262, 0.0
    %vm1269 = vcmp.ge.f32.partialorder %v1265, 0.0
    %v1270 = vmul.f32 %v1262, 0.1
    %v1271 = vmul.f32 %v1265, 0.1
    %v1272 = vsel %vm1268, %v1262, %v1270
    %v1273 = vsel %vm1269, %v1265, %v1271
    %v1274 = vpack.c.bf16 %v1273, %v1272
    %v1275 = vld [vmem:[#allocation8] sm:$0xf]
    %v1276 = vld [vmem:[#allocation8 + $0x4] sm:$0xf]
    %v1277 = vld [vmem:[#allocation8 + $0x8] sm:$0xf]
    %v1278 = vld [vmem:[#allocation8 + $0xc] sm:$0xf]
    %v1279 = vld [vmem:[#allocation8 + $0x10] sm:$0xf]
    %v1280 = vld [vmem:[#allocation8 + $0x14] sm:$0xf]
    %v1281 = vld [vmem:[#allocation8 + $0x18] sm:$0xf]
    %v1282 = vld [vmem:[#allocation8 + $0x1c] sm:$0xf]
    %v1283 = vld [vmem:[#allocation8 + $0x20] sm:$0xf]
    %v1284 = vld [vmem:[#allocation8 + $0x24] sm:$0xf]
    %v1285 = vld [vmem:[#allocation8 + $0x28] sm:$0xf]
    %v1286 = vld [vmem:[#allocation8 + $0x2c] sm:$0xf]
    %v1287 = vld [vmem:[#allocation8 + $0x30] sm:$0xf]
    %v1288 = vld [vmem:[#allocation8 + $0x34] sm:$0xf]
    %v1289 = vld [vmem:[#allocation8 + $0x38] sm:$0xf]
    %v1290 = vld [vmem:[#allocation8 + $0x3c] sm:$0xf]
    %v1291 = vld [vmem:[%s6] sm:$0x1]
    %v1293 = vlaneseq
    %v1294 = vshrl.u32 %v1293, 7
    %v1295 = vsub.s32 0, %v1294
    %v1296 = vrot.slane %v1291, %v1295
    %v1314 = vunpack.c.l.b16 %v1275
    %v1315 = vunpack.c.l.b16 %v1276
    %v1316 = vunpack.c.l.b16 %v1277
    %v1317 = vunpack.c.l.b16 %v1278
    %v1318 = vunpack.c.l.b16 %v1279
    %v1319 = vunpack.c.l.b16 %v1280
    %v1320 = vunpack.c.l.b16 %v1281
    %v1321 = vunpack.c.l.b16 %v1282
    %v1322 = vunpack.c.l.b16 %v1283
    %v1323 = vunpack.c.l.b16 %v1284
    %v1324 = vunpack.c.l.b16 %v1285
    %v1325 = vunpack.c.l.b16 %v1286
    %v1326 = vunpack.c.l.b16 %v1287
    %v1327 = vunpack.c.l.b16 %v1288
    %v1328 = vunpack.c.l.b16 %v1289
    %v1329 = vunpack.c.l.b16 %v1290
    %v1330 = vpack.c.b16 %v1315, %v1314
    %v1331 = vpack.c.b16 %v1317, %v1316
    %v1332 = vpack.c.b16 %v1319, %v1318
    %v1333 = vpack.c.b16 %v1321, %v1320
    %v1334 = vpack.c.b16 %v1323, %v1322
    %v1335 = vpack.c.b16 %v1325, %v1324
    %v1336 = vpack.c.b16 %v1327, %v1326
    %v1337 = vpack.c.b16 %v1329, %v1328
    %1346 = vmatprep.subr.bf16.mxu0 0
    %1347 = vmatpush1.bf16.msra.mxu0 %v1330
    %1348 = vmatprep.subr.bf16.mxu0 0
    %1349 = vmatpush1.bf16.msra.mxu0 %v1331
    %1350 = vmatprep.subr.bf16.mxu0 0
    %1351 = vmatpush1.bf16.msra.mxu0 %v1332
    %1352 = vmatprep.subr.bf16.mxu0 0
    %1353 = vmatpush1.bf16.msra.mxu0 %v1333
    %1354 = vmatprep.subr.bf16.mxu0 0
    %1355 = vmatpush1.bf16.msra.mxu0 %v1334
    %1356 = vmatprep.subr.bf16.mxu0 0
    %1357 = vmatpush1.bf16.msra.mxu0 %v1335
    %1358 = vmatprep.subr.bf16.mxu0 0
    %1359 = vmatpush1.bf16.msra.mxu0 %v1336
    %1360 = vmatprep.subr.bf16.mxu0 0
    %1361 = vmatpush1.bf16.msra.mxu0 %v1337
    %1362 = vmatprep.subr.bf16.mxu0 0
    %1363 = vmatpush1.bf16.msra.mxu0 0
    %1364 = vmatprep.subr.bf16.mxu0 0
    %1365 = vmatpush1.bf16.msra.mxu0 0
    %1366 = vmatprep.subr.bf16.mxu0 0
    %1367 = vmatpush1.bf16.msra.mxu0 0
    %1368 = vmatprep.subr.bf16.mxu0 0
    %1369 = vmatpush1.bf16.msra.mxu0 0
    %1370 = vmatprep.subr.bf16.mxu0 0
    %1371 = vmatpush1.bf16.msra.mxu0 0
    %1372 = vmatprep.subr.bf16.mxu0 0
    %1373 = vmatpush1.bf16.msra.mxu0 0
    %1374 = vmatprep.subr.bf16.mxu0 0
    %1375 = vmatpush1.bf16.msra.mxu0 0
    %1376 = vmatprep.subr.bf16.mxu0 0
    %1377 = vmatpush1.bf16.msra.mxu0 0
    %1378 = vmatprep.mubr.bf16.mxu0 0
    %1379 = vmatmul.mubr.bf16.gmra.mrb[0].mxu0 %v1274
    %v1380 = vpop.f32.mrb[0].mxu0
    %v1381 = vadd.f32 %v1296, %v1380
    %v1382 = vpop.f32.mrb[0].mxu0
    %v1383 = vpop.f32.mrb[0].mxu0
    %v1384 = vadd.f32 %v1296, %v1383
    %v1385 = vpop.f32.mrb[0].mxu0
    %1386 = vdwg.mxu0
    %vm1387 = vcmp.ge.f32.partialorder %v1381, 0.0
    %vm1388 = vcmp.ge.f32.partialorder %v1384, 0.0
    %v1389 = vmul.f32 %v1381, 0.1
    %v1390 = vmul.f32 %v1384, 0.1
    %v1391 = vsel %vm1387, %v1381, %v1389
    %v1392 = vsel %vm1388, %v1384, %v1390
    %v1393 = vpack.c.bf16 %v1392, %v1391
    %v1394 = vld [vmem:[#allocation10] sm:$0xf]
    %v1395 = vld [vmem:[#allocation10 + $0x4] sm:$0xf]
    %v1396 = vld [vmem:[#allocation10 + $0x8] sm:$0xf]
    %v1397 = vld [vmem:[#allocation10 + $0xc] sm:$0xf]
    %v1398 = vld [vmem:[#allocation10 + $0x10] sm:$0xf]
    %v1399 = vld [vmem:[#allocation10 + $0x14] sm:$0xf]
    %v1400 = vld [vmem:[#allocation10 + $0x18] sm:$0xf]
    %v1401 = vld [vmem:[#allocation10 + $0x1c] sm:$0xf]
    %v1402 = vld [vmem:[#allocation10 + $0x20] sm:$0xf]
    %v1403 = vld [vmem:[#allocation10 + $0x24] sm:$0xf]
    %v1404 = vld [vmem:[#allocation10 + $0x28] sm:$0xf]
    %v1405 = vld [vmem:[#allocation10 + $0x2c] sm:$0xf]
    %v1406 = vld [vmem:[#allocation10 + $0x30] sm:$0xf]
    %v1407 = vld [vmem:[#allocation10 + $0x34] sm:$0xf]
    %v1408 = vld [vmem:[#allocation10 + $0x38] sm:$0xf]
    %v1409 = vld [vmem:[#allocation10 + $0x3c] sm:$0xf]
    %v1410 = vld [vmem:[%s8] sm:$0x1]
    %v1412 = vlaneseq
    %v1413 = vshrl.u32 %v1412, 7
    %v1414 = vsub.s32 0, %v1413
    %v1415 = vrot.slane %v1410, %v1414
    %v1433 = vunpack.c.l.b16 %v1394
    %v1434 = vunpack.c.l.b16 %v1395
    %v1435 = vunpack.c.l.b16 %v1396
    %v1436 = vunpack.c.l.b16 %v1397
    %v1437 = vunpack.c.l.b16 %v1398
    %v1438 = vunpack.c.l.b16 %v1399
    %v1439 = vunpack.c.l.b16 %v1400
    %v1440 = vunpack.c.l.b16 %v1401
    %v1441 = vunpack.c.l.b16 %v1402
    %v1442 = vunpack.c.l.b16 %v1403
    %v1443 = vunpack.c.l.b16 %v1404
    %v1444 = vunpack.c.l.b16 %v1405
    %v1445 = vunpack.c.l.b16 %v1406
    %v1446 = vunpack.c.l.b16 %v1407
    %v1447 = vunpack.c.l.b16 %v1408
    %v1448 = vunpack.c.l.b16 %v1409
    %v1449 = vpack.c.b16 %v1434, %v1433
    %v1450 = vpack.c.b16 %v1436, %v1435
    %v1451 = vpack.c.b16 %v1438, %v1437
    %v1452 = vpack.c.b16 %v1440, %v1439
    %v1453 = vpack.c.b16 %v1442, %v1441
    %v1454 = vpack.c.b16 %v1444, %v1443
    %v1455 = vpack.c.b16 %v1446, %v1445
    %v1456 = vpack.c.b16 %v1448, %v1447
    %1465 = vmatprep.subr.bf16.mxu0 0
    %1466 = vmatpush1.bf16.msra.mxu0 %v1449
    %1467 = vmatprep.subr.bf16.mxu0 0
    %1468 = vmatpush1.bf16.msra.mxu0 %v1450
    %1469 = vmatprep.subr.bf16.mxu0 0
    %1470 = vmatpush1.bf16.msra.mxu0 %v1451
    %1471 = vmatprep.subr.bf16.mxu0 0
    %1472 = vmatpush1.bf16.msra.mxu0 %v1452
    %1473 = vmatprep.subr.bf16.mxu0 0
    %1474 = vmatpush1.bf16.msra.mxu0 %v1453
    %1475 = vmatprep.subr.bf16.mxu0 0
    %1476 = vmatpush1.bf16.msra.mxu0 %v1454
    %1477 = vmatprep.subr.bf16.mxu0 0
    %1478 = vmatpush1.bf16.msra.mxu0 %v1455
    %1479 = vmatprep.subr.bf16.mxu0 0
    %1480 = vmatpush1.bf16.msra.mxu0 %v1456
    %1481 = vmatprep.subr.bf16.mxu0 0
    %1482 = vmatpush1.bf16.msra.mxu0 0
    %1483 = vmatprep.subr.bf16.mxu0 0
    %1484 = vmatpush1.bf16.msra.mxu0 0
    %1485 = vmatprep.subr.bf16.mxu0 0
    %1486 = vmatpush1.bf16.msra.mxu0 0
    %1487 = vmatprep.subr.bf16.mxu0 0
    %1488 = vmatpush1.bf16.msra.mxu0 0
    %1489 = vmatprep.subr.bf16.mxu0 0
    %1490 = vmatpush1.bf16.msra.mxu0 0
    %1491 = vmatprep.subr.bf16.mxu0 0
    %1492 = vmatpush1.bf16.msra.mxu0 0
    %1493 = vmatprep.subr.bf16.mxu0 0
    %1494 = vmatpush1.bf16.msra.mxu0 0
    %1495 = vmatprep.subr.bf16.mxu0 0
    %1496 = vmatpush1.bf16.msra.mxu0 0
    %1497 = vmatprep.mubr.bf16.mxu0 0
    %1498 = vmatmul.mubr.bf16.gmra.mrb[0].mxu0 %v1393
    %v1499 = vpop.f32.mrb[0].mxu0
    %v1500 = vadd.f32 %v1415, %v1499
    %v1501 = vpop.f32.mrb[0].mxu0
    %v1502 = vpop.f32.mrb[0].mxu0
    %v1503 = vadd.f32 %v1415, %v1502
    %v1504 = vpop.f32.mrb[0].mxu0
    %1505 = vdwg.mxu0
    %1506 = vmax.xlane.f32.xlu0 %v1500
    %v1507 = vpop.xlane.xlu0 %1506
    %1508 = vmax.xlane.f32.xlu0 %v1503
    %v1509 = vpop.xlane.xlu0 %1508
    %v1510 = vsub.f32 %v1500, %v1507
    %v1511 = vsub.f32 %v1503, %v1509
    %v1512 = vmul.f32 %v1510, 1.442695
    %v1513 = vpow.pop %v1512
    %v1514 = vmul.f32 %v1511, 1.442695
    %v1515 = vpow.pop %v1514
    %1516 = vadd.xlane.f32.xlu0 %v1513
    %v1517 = vpop.xlane.xlu0 %1516
    %1518 = vadd.xlane.f32.xlu0 %v1515
    %v1519 = vpop.xlane.xlu0 %1518
    %v1520 = vlog2.pop %v1517
    %v1521 = vmul.f32 %v1520, 0.6931472
    %v1522 = vlog2.pop %v1519
    %v1523 = vmul.f32 %v1522, 0.6931472
    %v1524 = vsub.f32 %v1510, %v1521
    %v1525 = vsub.f32 %v1511, %v1523
    %1526 = vst [vmem:[#allocation11] sm:$0xff] %v1524
    %1527 = vst [vmem:[#allocation11 + $0x8] sm:$0xff] %v1525
    // Predicated region
    $region58: #{tpu_custom_call.1} parent=1 // pred_check
      _
    $region59: #{tpu_custom_call.1} parent=1 // pred_check_branch
      %1529 = sbr.rel (0) target = $region61
    $region60: #{tpu_custom_call.1} parent=1 // pred_region
      %s1531 = ssub.s32 256, 256
      %1532 = vsyncadd [#allocation4], %s1531
      %s1533 = sshll.u32 [#allocation11], 4
      %s1534 = int_to_ptr.vmem [resolvable:$true] %s1533
      %1539 = dma.vmem_to_hbm [thread:$0]  %s1534, 256, %s9, [#allocation4], 128, 128, 8
    $region61: #{tpu_custom_call.1} parent=1 // pred_fallthru
      _
    // Predicated region
    $region62: #{tpu_custom_call.1} parent=1 // pred_check
      _
    $region63: #{tpu_custom_call.1} parent=1 // pred_check_branch
      %1541 = sbr.rel (0) target = $region65
    $region64: #{tpu_custom_call.1} parent=1 // pred_region
      %1542 = dma.done [#allocation4], 256
    $region65: #{tpu_custom_call.1} parent=1 // pred_fallthru
      _
    %1543 = vsyncpa [#allocation3], 1
    %1544 = vsyncpa [#allocation6], 1
    %1545 = vsyncpa [#allocation9], 1
    %1546 = vsyncpa [#allocation4], 1

</llo_original>
